<compile_context>
chip_gen: v7x
topology: tpu7x:2x2x1
jax: 0.10.0
libtpu: 0.0.40
codegen_flags: <defaults>
</compile_context>

<pallas_src>
import jax
import jax.numpy as jnp
from jax.experimental import pallas as pl
from jax.experimental.pallas import tpu as pltpu

IN_DIM = 34
OUT_DIM = 12
HID = 256
PAD_IN = 128    # 34 zero-padded to one full lane-width
PAD_OUT = 128   # 12 zero-padded to one full lane-width


def dnn_kernel(x_ref, w1_ref, b1_ref, w2_ref, b2_ref, w3_ref, b3_ref,
               w4_ref, b4_ref, o_ref):
    x = x_ref[...]

    # Layer 1: [tb, 128] @ [128, 256] + b1.  (zero-padded K columns contribute nothing)
    h = jnp.dot(x, w1_ref[...], preferred_element_type=jnp.float32) + b1_ref[...]
    # LeakyReLU(negative_slope=True==1.0) is exactly identity -> no op emitted.

    # Layer 2: [tb, 256] @ [256, 256] + b2.
    h = jnp.dot(h, w2_ref[...], preferred_element_type=jnp.float32) + b2_ref[...]

    # Layer 3: [tb, 256] @ [256, 256] + b3.
    h = jnp.dot(h, w3_ref[...], preferred_element_type=jnp.float32) + b3_ref[...]

    # Dropout(0.15): identity at inference time.

    # Layer 4: [tb, 256] @ [256, 128] + b4, then tanh.  Padded output columns are tanh(0)=0.
    h = jnp.dot(h, w4_ref[...], preferred_element_type=jnp.float32) + b4_ref[...]
    o_ref[...] = jnp.tanh(h).astype(o_ref.dtype)


def dnn_forward(x, params, *, tb=256):
    """x: [B, 34] float32.  params: dict of transposed ([in, out]) weights/biases."""
    B = x.shape[0]
    nb = pl.cdiv(B, tb)          # grid steps (>=2 keeps both v7x TensorCores busy for big B)
    B_pad = nb * tb

    # --- wrapper-side zero padding: batch -> B_pad, features 34 -> 128, out 12 -> 128 ---
    x_p = jnp.zeros((B_pad, PAD_IN), jnp.float32).at[:B, :IN_DIM].set(x)
    w1 = jnp.zeros((PAD_IN, HID), jnp.float32).at[:IN_DIM, :].set(params["w1"])
    b1 = params["b1"]
    w2, b2 = params["w2"], params["b2"]
    w3, b3 = params["w3"], params["b3"]
    w4 = jnp.zeros((HID, PAD_OUT), jnp.float32).at[:, :OUT_DIM].set(params["w4"])
    b4 = jnp.zeros((1, PAD_OUT), jnp.float32).at[:, :OUT_DIM].set(params["b4"])

    # Weights/biases use full-array blocks with a constant index_map -> stay VMEM-resident
    # across the whole grid (no per-step HBM re-read).
    def full_spec(arr):
        return pl.BlockSpec(arr.shape, lambda i: (0,) * arr.ndim)

    grid_spec = pltpu.PrefetchScalarGridSpec(
        num_scalar_prefetch=0,
        grid=(nb,),
        in_specs=[
            pl.BlockSpec((tb, PAD_IN), lambda i: (i, 0)),
            full_spec(w1), full_spec(b1),
            full_spec(w2), full_spec(b2),
            full_spec(w3), full_spec(b3),
            full_spec(w4), full_spec(b4),
        ],
        out_specs=pl.BlockSpec((tb, PAD_OUT), lambda i: (i, 0)),
    )

    flops = 2 * B_pad * (PAD_IN * HID + HID * HID + HID * HID + HID * PAD_OUT)
    transcendentals = B_pad * PAD_OUT  # tanh
    bytes_accessed = 4 * (
        B_pad * PAD_IN                              # x
        + PAD_IN * HID + HID                        # w1, b1
        + HID * HID + HID                           # w2, b2
        + HID * HID + HID                           # w3, b3
        + HID * PAD_OUT + PAD_OUT                   # w4, b4
        + B_pad * PAD_OUT                           # out
    )

    out = pl.pallas_call(
        dnn_kernel,
        out_shape=jax.ShapeDtypeStruct((B_pad, PAD_OUT), jnp.float32),
        grid_spec=grid_spec,
        compiler_params=pltpu.CompilerParams(
            dimension_semantics=("parallel",)),
        cost_estimate=pl.CostEstimate(
            flops=flops,
            transcendentals=transcendentals,
            bytes_accessed=bytes_accessed),
    )(x_p, w1, b1, w2, b2, w3, b3, w4, b4)

    return out[:B, :OUT_DIM]


def init_params(key):
    """Deterministic init mimicking PyTorch Linear default (U[-1/sqrt(fan_in), +...])."""
    dims = [(IN_DIM, HID), (HID, HID), (HID, HID), (HID, OUT_DIM)]
    params = {}
    for idx, (fan_in, fan_out) in enumerate(dims, start=1):
        key, kw, kb = jax.random.split(key, 3)
        bound = 1.0 / jnp.sqrt(jnp.float32(fan_in))
        # Stored already transposed: [in, out]  (PyTorch stores [out, in]).
        params[f"w{idx}"] = jax.random.uniform(
            kw, (fan_in, fan_out), jnp.float32, -bound, bound)
        params[f"b{idx}"] = jax.random.uniform(
            kb, (1, fan_out), jnp.float32, -bound, bound)
    return params


def reference_forward(x, params):
    """Pure-JAX reference of the same math (LeakyReLU(slope=1.0) == identity)."""
    h = x @ params["w1"] + params["b1"]
    h = h @ params["w2"] + params["b2"]
    h = h @ params["w3"] + params["b3"]
    return jnp.tanh(h @ params["w4"] + params["b4"])


if __name__ == "__main__":
    key = jax.random.PRNGKey(0)
    key, kx = jax.random.split(key)

    # Awkward batch size on purpose: exercises the cdiv + pad path (padded to 512 -> 2
    # grid steps, so a v7x chip uses both TensorCores).
    B = 300
    x = jax.random.normal(kx, (B, IN_DIM), jnp.float32)

    params = init_params(key)

    out = dnn_forward(x, params, tb=256)
    out = jax.block_until_ready(out)

    ref = reference_forward(x, params)
    assert out.shape == (B, OUT_DIM)
    assert jnp.allclose(out, ref, atol=1e-5, rtol=1e-5)

    print("KERNEL_OK")
</pallas_src>

<mosaic_0001>
module attributes {stable_mosaic.version = 11 : i64} {
  func.func @dnn_kernel(%arg0: i32, %arg1: memref<256x128xf32, #tpu.memory_space<vmem>>, %arg2: memref<128x256xf32, #tpu.memory_space<vmem>>, %arg3: memref<1x256xf32, #tpu.memory_space<vmem>>, %arg4: memref<256x256xf32, #tpu.memory_space<vmem>>, %arg5: memref<1x256xf32, #tpu.memory_space<vmem>>, %arg6: memref<256x256xf32, #tpu.memory_space<vmem>>, %arg7: memref<1x256xf32, #tpu.memory_space<vmem>>, %arg8: memref<256x128xf32, #tpu.memory_space<vmem>>, %arg9: memref<1x128xf32, #tpu.memory_space<vmem>>, %arg10: memref<256x128xf32, #tpu.memory_space<vmem>>) attributes {dimension_semantics = [#tpu.dimension_semantics<parallel>], iteration_bounds = array<i64: 2>, scalar_prefetch = 0 : i64, scratch_operands = 0 : i64, tpu.core_type = #tpu.core_type<tc>, window_params = [{transform_indices = @transform_0, window_bounds = array<i64: 256, 128>}, {pipeline_mode = #tpu.pipeline_mode<synchronous>, transform_indices = @transform_1, window_bounds = array<i64: 128, 256>}, {pipeline_mode = #tpu.pipeline_mode<synchronous>, transform_indices = @transform_2, window_bounds = array<i64: 1, 256>}, {pipeline_mode = #tpu.pipeline_mode<synchronous>, transform_indices = @transform_3, window_bounds = array<i64: 256, 256>}, {pipeline_mode = #tpu.pipeline_mode<synchronous>, transform_indices = @transform_4, window_bounds = array<i64: 1, 256>}, {pipeline_mode = #tpu.pipeline_mode<synchronous>, transform_indices = @transform_5, window_bounds = array<i64: 256, 256>}, {pipeline_mode = #tpu.pipeline_mode<synchronous>, transform_indices = @transform_6, window_bounds = array<i64: 1, 256>}, {pipeline_mode = #tpu.pipeline_mode<synchronous>, transform_indices = @transform_7, window_bounds = array<i64: 256, 128>}, {pipeline_mode = #tpu.pipeline_mode<synchronous>, transform_indices = @transform_8, window_bounds = array<i64: 1, 128>}, {transform_indices = @transform_9, window_bounds = array<i64: 256, 128>}]} {
    %c0 = arith.constant 0 : index
    %c0_0 = arith.constant 0 : index
    %0 = vector.load %arg1[%c0, %c0_0] : memref<256x128xf32, #tpu.memory_space<vmem>>, vector<256x128xf32>
    %c0_1 = arith.constant 0 : index
    %c0_2 = arith.constant 0 : index
    %1 = vector.load %arg2[%c0_1, %c0_2] : memref<128x256xf32, #tpu.memory_space<vmem>>, vector<128x256xf32>
    %cst = arith.constant dense<0.000000e+00> : vector<256x256xf32>
    %2 = tpu.matmul %0, %1, %cst {dimension_numbers = #tpu.dot_dimension_numbers<[1], [0], [0], [1], [0, 0, 1, 1], [], []>} : vector<256x128xf32>, vector<128x256xf32>, vector<256x256xf32> -> vector<256x256xf32>
    %c0_3 = arith.constant 0 : index
    %c0_4 = arith.constant 0 : index
    %3 = vector.load %arg3[%c0_3, %c0_4] : memref<1x256xf32, #tpu.memory_space<vmem>>, vector<1x256xf32>
    %4 = vector.broadcast %3 : vector<1x256xf32> to vector<256x256xf32>
    %5 = arith.addf %2, %4 : vector<256x256xf32>
    %c0_5 = arith.constant 0 : index
    %c0_6 = arith.constant 0 : index
    %6 = vector.load %arg4[%c0_5, %c0_6] : memref<256x256xf32, #tpu.memory_space<vmem>>, vector<256x256xf32>
    %cst_7 = arith.constant dense<0.000000e+00> : vector<256x256xf32>
    %7 = tpu.matmul %5, %6, %cst_7 {dimension_numbers = #tpu.dot_dimension_numbers<[1], [0], [0], [1], [0, 0, 1, 1], [], []>} : vector<256x256xf32>, vector<256x256xf32>, vector<256x256xf32> -> vector<256x256xf32>
    %c0_8 = arith.constant 0 : index
    %c0_9 = arith.constant 0 : index
    %8 = vector.load %arg5[%c0_8, %c0_9] : memref<1x256xf32, #tpu.memory_space<vmem>>, vector<1x256xf32>
    %9 = vector.broadcast %8 : vector<1x256xf32> to vector<256x256xf32>
    %10 = arith.addf %7, %9 : vector<256x256xf32>
    %c0_10 = arith.constant 0 : index
    %c0_11 = arith.constant 0 : index
    %11 = vector.load %arg6[%c0_10, %c0_11] : memref<256x256xf32, #tpu.memory_space<vmem>>, vector<256x256xf32>
    %cst_12 = arith.constant dense<0.000000e+00> : vector<256x256xf32>
    %12 = tpu.matmul %10, %11, %cst_12 {dimension_numbers = #tpu.dot_dimension_numbers<[1], [0], [0], [1], [0, 0, 1, 1], [], []>} : vector<256x256xf32>, vector<256x256xf32>, vector<256x256xf32> -> vector<256x256xf32>
    %c0_13 = arith.constant 0 : index
    %c0_14 = arith.constant 0 : index
    %13 = vector.load %arg7[%c0_13, %c0_14] : memref<1x256xf32, #tpu.memory_space<vmem>>, vector<1x256xf32>
    %14 = vector.broadcast %13 : vector<1x256xf32> to vector<256x256xf32>
    %15 = arith.addf %12, %14 : vector<256x256xf32>
    %c0_15 = arith.constant 0 : index
    %c0_16 = arith.constant 0 : index
    %16 = vector.load %arg8[%c0_15, %c0_16] : memref<256x128xf32, #tpu.memory_space<vmem>>, vector<256x128xf32>
    %cst_17 = arith.constant dense<0.000000e+00> : vector<256x128xf32>
    %17 = tpu.matmul %15, %16, %cst_17 {dimension_numbers = #tpu.dot_dimension_numbers<[1], [0], [0], [1], [0, 0, 1, 1], [], []>} : vector<256x256xf32>, vector<256x128xf32>, vector<256x128xf32> -> vector<256x128xf32>
    %c0_18 = arith.constant 0 : index
    %c0_19 = arith.constant 0 : index
    %18 = vector.load %arg9[%c0_18, %c0_19] : memref<1x128xf32, #tpu.memory_space<vmem>>, vector<1x128xf32>
    %19 = vector.broadcast %18 : vector<1x128xf32> to vector<256x128xf32>
    %20 = arith.addf %17, %19 : vector<256x128xf32>
    %21 = math.tanh %20 : vector<256x128xf32>
    %c0_20 = arith.constant 0 : index
    %c0_21 = arith.constant 0 : index
    %22 = vector.load %arg10[%c0_20, %c0_21] : memref<256x128xf32, #tpu.memory_space<vmem>>, vector<256x128xf32>
    tpu.vector_store %arg10[%c0_20, %c0_21], %21 {strides = array<i32>} : memref<256x128xf32, #tpu.memory_space<vmem>>, vector<256x128xf32>,
    return
  }
  func.func @transform_0(%arg0: i32) -> (i32, i32) {
    %c0_i32 = arith.constant 0 : i32
    %c0_i32_0 = arith.constant 0 : i32
    return %arg0, %c0_i32 : i32, i32
  }
  func.func @transform_1(%arg0: i32) -> (i32, i32) {
    %c0_i32 = arith.constant 0 : i32
    %c0_i32_0 = arith.constant 0 : i32
    %c0_i32_1 = arith.constant 0 : i32
    return %c0_i32, %c0_i32_0 : i32, i32
  }
  func.func @transform_2(%arg0: i32) -> (i32, i32) {
    %c0_i32 = arith.constant 0 : i32
    %c0_i32_0 = arith.constant 0 : i32
    %c0_i32_1 = arith.constant 0 : i32
    return %c0_i32, %c0_i32_0 : i32, i32
  }
  func.func @transform_3(%arg0: i32) -> (i32, i32) {
    %c0_i32 = arith.constant 0 : i32
    %c0_i32_0 = arith.constant 0 : i32
    %c0_i32_1 = arith.constant 0 : i32
    return %c0_i32, %c0_i32_0 : i32, i32
  }
  func.func @transform_4(%arg0: i32) -> (i32, i32) {
    %c0_i32 = arith.constant 0 : i32
    %c0_i32_0 = arith.constant 0 : i32
    %c0_i32_1 = arith.constant 0 : i32
    return %c0_i32, %c0_i32_0 : i32, i32
  }
  func.func @transform_5(%arg0: i32) -> (i32, i32) {
    %c0_i32 = arith.constant 0 : i32
    %c0_i32_0 = arith.constant 0 : i32
    %c0_i32_1 = arith.constant 0 : i32
    return %c0_i32, %c0_i32_0 : i32, i32
  }
  func.func @transform_6(%arg0: i32) -> (i32, i32) {
    %c0_i32 = arith.constant 0 : i32
    %c0_i32_0 = arith.constant 0 : i32
    %c0_i32_1 = arith.constant 0 : i32
    return %c0_i32, %c0_i32_0 : i32, i32
  }
  func.func @transform_7(%arg0: i32) -> (i32, i32) {
    %c0_i32 = arith.constant 0 : i32
    %c0_i32_0 = arith.constant 0 : i32
    %c0_i32_1 = arith.constant 0 : i32
    return %c0_i32, %c0_i32_0 : i32, i32
  }
  func.func @transform_8(%arg0: i32) -> (i32, i32) {
    %c0_i32 = arith.constant 0 : i32
    %c0_i32_0 = arith.constant 0 : i32
    %c0_i32_1 = arith.constant 0 : i32
    return %c0_i32, %c0_i32_0 : i32, i32
  }
  func.func @transform_9(%arg0: i32) -> (i32, i32) {
    %c0_i32 = arith.constant 0 : i32
    %c0_i32_0 = arith.constant 0 : i32
    return %arg0, %c0_i32 : i32, i32
  }
}

</mosaic_0001>

<llo_original>
// kernel: tpu_custom_call.1
$region0: #{tpu_custom_call.1}
  #allocation0 [shape = 'u32[]', space=smem, size = 0x4, offset = 0x4, fixed_abs, tag = 'smem constant byte address 0x4 - core index']
  #allocation1 [shape = 'u32[144,128]{1,0:T(1,128)}', space=vmem, size = 0x12000, scoped, tag = 'internal scratch']
  %s0 = inlined_call_operand.hbm [shape: f32[512,128], index: 0, kind: input, shape index: {}]
  %s1 = inlined_call_operand.hbm [shape: f32[128,256], index: 1, kind: input, shape index: {}]
  %s2 = inlined_call_operand.vmem [shape: f32[1,256], index: 2, kind: input, shape index: {}]
  %s3 = inlined_call_operand.hbm [shape: f32[256,256], index: 3, kind: input, shape index: {}]
  %s4 = inlined_call_operand.vmem [shape: f32[1,256], index: 4, kind: input, shape index: {}]
  %s5 = inlined_call_operand.hbm [shape: f32[256,256], index: 5, kind: input, shape index: {}]
  %s6 = inlined_call_operand.vmem [shape: f32[1,256], index: 6, kind: input, shape index: {}]
  %s7 = inlined_call_operand.hbm [shape: f32[256,128], index: 7, kind: input, shape index: {}]
  %s8 = inlined_call_operand.vmem [shape: f32[1,128], index: 8, kind: input, shape index: {}]
  %s9 = inlined_call_operand.hbm [shape: f32[512,128], index: 9, kind: output, shape index: {}]
  %s10 = sld [smem:[#allocation0]]
  $region89: #{tpu_custom_call.1} parent=0
    _
  %s12 = ssub.s32 1, %s10
  %s13 = scalar_select 0, %s12, %s10
  $region1: #{tpu_custom_call.1} parent=0
    #allocation2 [shape = 'u8[262144]{0}', space=vmem, size = 0x40000, scoped, tag = 'input window, operand 0']
    #allocation3 [shape = 's32[2]{0}', space=sflag, size = 0x8, scoped, tag = 'scoped memory for tpu_custom_call.1']
    #allocation4 [shape = 's32[2]{0}', space=sflag, size = 0x8, scoped, tag = 'scoped memory for tpu_custom_call.1']
    #allocation5 [shape = 'u8[131072]{0}', space=vmem, size = 0x20000, scoped, tag = 'input window, operand 1, single buffered']
    #allocation6 [shape = 's32[1]{0}', space=sflag, size = 0x4, scoped, tag = 'scoped memory for tpu_custom_call.1']
    #allocation7 [shape = 'u8[262144]{0}', space=vmem, size = 0x40000, scoped, tag = 'input window, operand 3, single buffered']
    #allocation8 [shape = 'u8[262144]{0}', space=vmem, size = 0x40000, scoped, tag = 'input window, operand 5, single buffered']
    #allocation9 [shape = 's32[1]{0}', space=sflag, size = 0x4, scoped, tag = 'scoped memory for tpu_custom_call.1']
    #allocation10 [shape = 'u8[131072]{0}', space=vmem, size = 0x20000, scoped, tag = 'input window, operand 7, single buffered']
    #allocation11 [shape = 'u8[262144]{0}', space=vmem, size = 0x40000, scoped, tag = 'output window, operand 0']
    %14 = vsyncpa [#allocation3], 0
    %s15 = scalar_lea.sflag [#allocation3], 1
    %16 = vsyncpa %s15, 0
    %17 = vsyncpa [#allocation6], 0
    %18 = vsyncpa [#allocation9], 0
    %19 = vsyncpa [#allocation4], 0
    %s20 = scalar_lea.sflag [#allocation4], 1
    %21 = vsyncpa %s20, 0
    loop: start=0, step=1, limit=4
    $region2: #{tpu_custom_call.1} parent=1 // loop_pre_header
      _
    $region3: #{tpu_custom_call.1} parent=1 // loop_header
      %s23 = sphi 0, %s27
      %p24 = scmp.ge.s32.totalorder %s23, 4
      %s33 = sphi 0, %s35
      %s36 = sphi 0, %s33
      %s37 = sphi 0, %s36
      %s53 = sphi 0, %s37
      %s57 = sphi 0, %s57
      %s59 = sphi 0, %s57
      %s60 = sphi 0, %s59
      %s74 = sphi 0, %s60
      %s78 = sphi 0, %s78
      %s80 = sphi 0, %s78
      %s81 = sphi 0, %s80
      %s95 = sphi 0, %s81
      %s99 = sphi 0, %s99
      %s101 = sphi 0, %s99
      %s102 = sphi 0, %s101
      %s116 = sphi 0, %s102
      %s120 = sphi 0, %s120
      %s122 = sphi 0, %s120
      %s123 = sphi 0, %s122
      %s137 = sphi 0, %s123
      %s141 = sphi 0, %s141
      %s143 = sphi 0, %s141
      %s144 = sphi 0, %s143
      %s158 = sphi 0, %s144
      %s162 = sphi 0, %s162
      %s164 = sphi 0, %s162
      %s165 = sphi 0, %s164
      %s179 = sphi 0, %s165
      %s183 = sphi 0, %s183
      %s185 = sphi 0, %s183
      %s186 = sphi 0, %s185
      %s200 = sphi 0, %s186
      %s204 = sphi 0, %s204
      %s206 = sphi 0, %s204
      %s207 = sphi 0, %s206
      %s221 = sphi 0, %s207
      %s227 = sphi 0, %s229
      %s230 = sphi 0, %s227
      %s231 = sphi 0, %s230
      %s247 = sphi 0, %s231
    $region4: #{tpu_custom_call.1} parent=1 // loop_header_branch
      %26 = sbr.rel (%p24) target = $region8
    $region5: #{tpu_custom_call.1} parent=1 // loop_body
      %s28 = ssub.s32 %s23, 1
      %s29 = ssub.s32 %s23, 2
      %s30 = sadd.s32 %s23, 1
      %s31 = ssub.s32 %s23, %s30
      %p32 = scmp.eq.s32.totalorder %s31, 0
      %s34 = sadd.s32 %s33, 1
      %s35 = scalar_select %p32, %s33, %s34
      %p38 = pneg %p32
      %p39 = scmp.eq.s32.totalorder %s23, 1
      %p40 = por %p38, %p39
      %p41 = scmp.ne.s32.totalorder %s33, %s36
      %p42 = scmp.eq.s32.totalorder %s23, 0
      %p43 = por %p41, %p42
      %p44 = scmp.ne.s32.totalorder %s33, %s36
      %p45 = scmp.eq.s32.totalorder %s28, 1
      %p46 = por %p44, %p45
      %p47 = scmp.ne.s32.totalorder %s36, %s37
      %p48 = scmp.eq.s32.totalorder %s28, 0
      %p49 = por %p47, %p48
      %p50 = scmp.ne.s32.totalorder %s36, %s37
      %p51 = scmp.eq.s32.totalorder %s29, 1
      %p52 = por %p50, %p51
      %p54 = scmp.ne.s32.totalorder %s37, %s53
      %p55 = scmp.eq.s32.totalorder %s29, 0
      %p56 = por %p54, %p55
      %s58 = sadd.s32 %s57, 1
      %p61 = scmp.eq.s32.totalorder %s23, 1
      %p62 = scmp.ne.s32.totalorder %s57, %s59
      %p63 = scmp.eq.s32.totalorder %s23, 0
      %p64 = por %p62, %p63
      %p65 = scmp.ne.s32.totalorder %s57, %s59
      %p66 = scmp.eq.s32.totalorder %s28, 1
      %p67 = por %p65, %p66
      %p68 = scmp.ne.s32.totalorder %s59, %s60
      %p69 = scmp.eq.s32.totalorder %s28, 0
      %p70 = por %p68, %p69
      %p71 = scmp.ne.s32.totalorder %s59, %s60
      %p72 = scmp.eq.s32.totalorder %s29, 1
      %p73 = por %p71, %p72
      %p75 = scmp.ne.s32.totalorder %s60, %s74
      %p76 = scmp.eq.s32.totalorder %s29, 0
      %p77 = por %p75, %p76
      %s79 = sadd.s32 %s78, 1
      %p82 = scmp.eq.s32.totalorder %s23, 1
      %p83 = scmp.ne.s32.totalorder %s78, %s80
      %p84 = scmp.eq.s32.totalorder %s23, 0
      %p85 = por %p83, %p84
      %p86 = scmp.ne.s32.totalorder %s78, %s80
      %p87 = scmp.eq.s32.totalorder %s28, 1
      %p88 = por %p86, %p87
      %p89 = scmp.ne.s32.totalorder %s80, %s81
      %p90 = scmp.eq.s32.totalorder %s28, 0
      %p91 = por %p89, %p90
      %p92 = scmp.ne.s32.totalorder %s80, %s81
      %p93 = scmp.eq.s32.totalorder %s29, 1
      %p94 = por %p92, %p93
      %p96 = scmp.ne.s32.totalorder %s81, %s95
      %p97 = scmp.eq.s32.totalorder %s29, 0
      %p98 = por %p96, %p97
      %s100 = sadd.s32 %s99, 1
      %p103 = scmp.eq.s32.totalorder %s23, 1
      %p104 = scmp.ne.s32.totalorder %s99, %s101
      %p105 = scmp.eq.s32.totalorder %s23, 0
      %p106 = por %p104, %p105
      %p107 = scmp.ne.s32.totalorder %s99, %s101
      %p108 = scmp.eq.s32.totalorder %s28, 1
      %p109 = por %p107, %p108
      %p110 = scmp.ne.s32.totalorder %s101, %s102
      %p111 = scmp.eq.s32.totalorder %s28, 0
      %p112 = por %p110, %p111
      %p113 = scmp.ne.s32.totalorder %s101, %s102
      %p114 = scmp.eq.s32.totalorder %s29, 1
      %p115 = por %p113, %p114
      %p117 = scmp.ne.s32.totalorder %s102, %s116
      %p118 = scmp.eq.s32.totalorder %s29, 0
      %p119 = por %p117, %p118
      %s121 = sadd.s32 %s120, 1
      %p124 = scmp.eq.s32.totalorder %s23, 1
      %p125 = scmp.ne.s32.totalorder %s120, %s122
      %p126 = scmp.eq.s32.totalorder %s23, 0
      %p127 = por %p125, %p126
      %p128 = scmp.ne.s32.totalorder %s120, %s122
      %p129 = scmp.eq.s32.totalorder %s28, 1
      %p130 = por %p128, %p129
      %p131 = scmp.ne.s32.totalorder %s122, %s123
      %p132 = scmp.eq.s32.totalorder %s28, 0
      %p133 = por %p131, %p132
      %p134 = scmp.ne.s32.totalorder %s122, %s123
      %p135 = scmp.eq.s32.totalorder %s29, 1
      %p136 = por %p134, %p135
      %p138 = scmp.ne.s32.totalorder %s123, %s137
      %p139 = scmp.eq.s32.totalorder %s29, 0
      %p140 = por %p138, %p139
      %s142 = sadd.s32 %s141, 1
      %p145 = scmp.eq.s32.totalorder %s23, 1
      %p146 = scmp.ne.s32.totalorder %s141, %s143
      %p147 = scmp.eq.s32.totalorder %s23, 0
      %p148 = por %p146, %p147
      %p149 = scmp.ne.s32.totalorder %s141, %s143
      %p150 = scmp.eq.s32.totalorder %s28, 1
      %p151 = por %p149, %p150
      %p152 = scmp.ne.s32.totalorder %s143, %s144
      %p153 = scmp.eq.s32.totalorder %s28, 0
      %p154 = por %p152, %p153
      %p155 = scmp.ne.s32.totalorder %s143, %s144
      %p156 = scmp.eq.s32.totalorder %s29, 1
      %p157 = por %p155, %p156
      %p159 = scmp.ne.s32.totalorder %s144, %s158
      %p160 = scmp.eq.s32.totalorder %s29, 0
      %p161 = por %p159, %p160
      %s163 = sadd.s32 %s162, 1
      %p166 = scmp.eq.s32.totalorder %s23, 1
      %p167 = scmp.ne.s32.totalorder %s162, %s164
      %p168 = scmp.eq.s32.totalorder %s23, 0
      %p169 = por %p167, %p168
      %p170 = scmp.ne.s32.totalorder %s162, %s164
      %p171 = scmp.eq.s32.totalorder %s28, 1
      %p172 = por %p170, %p171
      %p173 = scmp.ne.s32.totalorder %s164, %s165
      %p174 = scmp.eq.s32.totalorder %s28, 0
      %p175 = por %p173, %p174
      %p176 = scmp.ne.s32.totalorder %s164, %s165
      %p177 = scmp.eq.s32.totalorder %s29, 1
      %p178 = por %p176, %p177
      %p180 = scmp.ne.s32.totalorder %s165, %s179
      %p181 = scmp.eq.s32.totalorder %s29, 0
      %p182 = por %p180, %p181
      %s184 = sadd.s32 %s183, 1
      %p187 = scmp.eq.s32.totalorder %s23, 1
      %p188 = scmp.ne.s32.totalorder %s183, %s185
      %p189 = scmp.eq.s32.totalorder %s23, 0
      %p190 = por %p188, %p189
      %p191 = scmp.ne.s32.totalorder %s183, %s185
      %p192 = scmp.eq.s32.totalorder %s28, 1
      %p193 = por %p191, %p192
      %p194 = scmp.ne.s32.totalorder %s185, %s186
      %p195 = scmp.eq.s32.totalorder %s28, 0
      %p196 = por %p194, %p195
      %p197 = scmp.ne.s32.totalorder %s185, %s186
      %p198 = scmp.eq.s32.totalorder %s29, 1
      %p199 = por %p197, %p198
      %p201 = scmp.ne.s32.totalorder %s186, %s200
      %p202 = scmp.eq.s32.totalorder %s29, 0
      %p203 = por %p201, %p202
      %s205 = sadd.s32 %s204, 1
      %p208 = scmp.eq.s32.totalorder %s23, 1
      %p209 = scmp.ne.s32.totalorder %s204, %s206
      %p210 = scmp.eq.s32.totalorder %s23, 0
      %p211 = por %p209, %p210
      %p212 = scmp.ne.s32.totalorder %s204, %s206
      %p213 = scmp.eq.s32.totalorder %s28, 1
      %p214 = por %p212, %p213
      %p215 = scmp.ne.s32.totalorder %s206, %s207
      %p216 = scmp.eq.s32.totalorder %s28, 0
      %p217 = por %p215, %p216
      %p218 = scmp.ne.s32.totalorder %s206, %s207
      %p219 = scmp.eq.s32.totalorder %s29, 1
      %p220 = por %p218, %p219
      %p222 = scmp.ne.s32.totalorder %s207, %s221
      %p223 = scmp.eq.s32.totalorder %s29, 0
      %p224 = por %p222, %p223
      %s225 = ssub.s32 %s23, %s30
      %p226 = scmp.eq.s32.totalorder %s225, 0
      %s228 = sadd.s32 %s227, 1
      %s229 = scalar_select %p226, %s227, %s228
      %p232 = pneg %p226
      %p233 = scmp.eq.s32.totalorder %s23, 1
      %p234 = por %p232, %p233
      %p235 = scmp.ne.s32.totalorder %s227, %s230
      %p236 = scmp.eq.s32.totalorder %s23, 0
      %p237 = por %p235, %p236
      %p238 = scmp.ne.s32.totalorder %s227, %s230
      %p239 = scmp.eq.s32.totalorder %s28, 1
      %p240 = por %p238, %p239
      %p241 = scmp.ne.s32.totalorder %s230, %s231
      %p242 = scmp.eq.s32.totalorder %s28, 0
      %p243 = por %p241, %p242
      %p244 = scmp.ne.s32.totalorder %s230, %s231
      %p245 = scmp.eq.s32.totalorder %s29, 1
      %p246 = por %p244, %p245
      %p248 = scmp.ne.s32.totalorder %s231, %s247
      %p249 = scmp.eq.s32.totalorder %s29, 0
      %p250 = por %p248, %p249
      %p251 = scmp.le.s32.totalorder 1, %s23
      %p252 = scmp.lt.s32.totalorder %s23, 3
      %p253 = pnand %p251, %p252
      %p254 = pneg %p253
      // Predicated region
      $region9: #{tpu_custom_call.1} parent=5 // pred_check
        _
      $region10: #{tpu_custom_call.1} parent=5 // pred_check_branch
        %256 = sbr.rel (%p253) target = $region12
      $region11: #{tpu_custom_call.1} parent=5 // pred_region
        %s257 = ssub.s32 %s23, 1
        // Predicated region
        $region13: #{tpu_custom_call.1} parent=11 // pred_check
          %p258 = pneg %p70
        $region14: #{tpu_custom_call.1} parent=11 // pred_check_branch
          %260 = sbr.rel (%p258) target = $region16
        $region15: #{tpu_custom_call.1} parent=11 // pred_region
          %s262 = ssub.s32 4096, 4096
          %263 = vsyncadd [#allocation6], %s262
          %s264 = sshll.u32 [#allocation5], 4
          %s265 = int_to_ptr.vmem [resolvable:$true] %s264
          %270 = dma.hbm_to_vmem [thread:$0]  %s1, 4096, %s265, [#allocation6], 256, 256, 16
        $region16: #{tpu_custom_call.1} parent=11 // pred_fallthru
          _
        // Predicated region
        $region17: #{tpu_custom_call.1} parent=11 // pred_check
          %p271 = pneg %p91
        $region18: #{tpu_custom_call.1} parent=11 // pred_check_branch
          %273 = sbr.rel (%p271) target = $region20
        $region19: #{tpu_custom_call.1} parent=11 // pred_region
          _
        $region20: #{tpu_custom_call.1} parent=11 // pred_fallthru
          _
        // Predicated region
        $region21: #{tpu_custom_call.1} parent=11 // pred_check
          %p274 = pneg %p112
        $region22: #{tpu_custom_call.1} parent=11 // pred_check_branch
          %276 = sbr.rel (%p274) target = $region24
        $region23: #{tpu_custom_call.1} parent=11 // pred_region
          %s278 = ssub.s32 8192, 8192
          %279 = vsyncadd [#allocation6], %s278
          %s280 = sshll.u32 [#allocation7], 4
          %s281 = int_to_ptr.vmem [resolvable:$true] %s280
          %286 = dma.hbm_to_vmem [thread:$0]  %s3, 8192, %s281, [#allocation6], 256, 256, 16
        $region24: #{tpu_custom_call.1} parent=11 // pred_fallthru
          _
        // Predicated region
        $region25: #{tpu_custom_call.1} parent=11 // pred_check
          %p287 = pneg %p133
        $region26: #{tpu_custom_call.1} parent=11 // pred_check_branch
          %289 = sbr.rel (%p287) target = $region28
        $region27: #{tpu_custom_call.1} parent=11 // pred_region
          _
        $region28: #{tpu_custom_call.1} parent=11 // pred_fallthru
          _
        // Predicated region
        $region29: #{tpu_custom_call.1} parent=11 // pred_check
          %p290 = pneg %p154
        $region30: #{tpu_custom_call.1} parent=11 // pred_check_branch
          %292 = sbr.rel (%p290) target = $region32
        $region31: #{tpu_custom_call.1} parent=11 // pred_region
          %s294 = ssub.s32 8192, 8192
          %295 = vsyncadd [#allocation9], %s294
          %s296 = sshll.u32 [#allocation8], 4
          %s297 = int_to_ptr.vmem [resolvable:$true] %s296
          %302 = dma.hbm_to_vmem [thread:$0]  %s5, 8192, %s297, [#allocation9], 256, 256, 16
        $region32: #{tpu_custom_call.1} parent=11 // pred_fallthru
          _
        // Predicated region
        $region33: #{tpu_custom_call.1} parent=11 // pred_check
          %p303 = pneg %p175
        $region34: #{tpu_custom_call.1} parent=11 // pred_check_branch
          %305 = sbr.rel (%p303) target = $region36
        $region35: #{tpu_custom_call.1} parent=11 // pred_region
          _
        $region36: #{tpu_custom_call.1} parent=11 // pred_fallthru
          _
        // Predicated region
        $region37: #{tpu_custom_call.1} parent=11 // pred_check
          %p306 = pneg %p196
        $region38: #{tpu_custom_call.1} parent=11 // pred_check_branch
          %308 = sbr.rel (%p306) target = $region40
        $region39: #{tpu_custom_call.1} parent=11 // pred_region
          %s310 = ssub.s32 4096, 4096
          %311 = vsyncadd [#allocation9], %s310
          %s312 = sshll.u32 [#allocation10], 4
          %s313 = int_to_ptr.vmem [resolvable:$true] %s312
          %318 = dma.hbm_to_vmem [thread:$0]  %s7, 4096, %s313, [#allocation9], 128, 128, 8
        $region40: #{tpu_custom_call.1} parent=11 // pred_fallthru
          _
        // Predicated region
        $region41: #{tpu_custom_call.1} parent=11 // pred_check
          %p319 = pneg %p217
        $region42: #{tpu_custom_call.1} parent=11 // pred_check_branch
          %321 = sbr.rel (%p319) target = $region44
        $region43: #{tpu_custom_call.1} parent=11 // pred_region
          _
        $region44: #{tpu_custom_call.1} parent=11 // pred_fallthru
          _
      $region12: #{tpu_custom_call.1} parent=5 // pred_fallthru
        _
      %p322 = scmp.lt.s32.totalorder %s23, 2
      // Predicated region
      $region45: #{tpu_custom_call.1} parent=5 // pred_check
        %p323 = pneg %p322
      $region46: #{tpu_custom_call.1} parent=5 // pred_check_branch
        %325 = sbr.rel (%p323) target = $region48
      $region47: #{tpu_custom_call.1} parent=5 // pred_region
        // Predicated region
        $region49: #{tpu_custom_call.1} parent=47 // pred_check
          %p326 = pneg %p43
        $region50: #{tpu_custom_call.1} parent=47 // pred_check_branch
          %328 = sbr.rel (%p326) target = $region52
        $region51: #{tpu_custom_call.1} parent=47 // pred_region
          %s329 = sand.u32 %s33, 1
          %s330 = scalar_lea.sflag [#allocation3], %s329
          %s331 = sand.u32 %s33, 1
          %s332 = smul.addr %s331, 256
          %s333 = scalar_lea.vmem [#allocation2], %s332
          %s334 = smul.u32 32, %s23
          %s336 = ssub.s32 4096, 4096
          %337 = vsyncadd %s330, %s336
          %s338 = smul.addr %s334, 128
          %s339 = scalar_lea.hbm %s0, %s338
          %s340 = sshll.u32 %s333, 4
          %s341 = int_to_ptr.vmem [resolvable:$true] %s340
          %346 = dma.hbm_to_vmem [thread:$0]  %s339, 4096, %s341, %s330, 128, 128, 8
        $region52: #{tpu_custom_call.1} parent=47 // pred_fallthru
          _
      $region48: #{tpu_custom_call.1} parent=5 // pred_fallthru
        _
      %p347 = scmp.le.s32.totalorder 1, %s23
      %p348 = scmp.lt.s32.totalorder %s23, 3
      %p349 = pnand %p347, %p348
      %p350 = pneg %p349
      // Predicated region
      $region53: #{tpu_custom_call.1} parent=5 // pred_check
        _
      $region54: #{tpu_custom_call.1} parent=5 // pred_check_branch
        %352 = sbr.rel (%p349) target = $region56
      $region55: #{tpu_custom_call.1} parent=5 // pred_region
        %s353 = ssub.s32 %s23, 1
        %s354 = sand.u32 %s36, 1
        %s355 = scalar_lea.sflag [#allocation3], %s354
        %s356 = sand.u32 %s36, 1
        %s357 = smul.addr %s356, 256
        %s358 = scalar_lea.vmem [#allocation2], %s357
        // Predicated region
        $region57: #{tpu_custom_call.1} parent=55 // pred_check
          %p359 = pneg %p49
        $region58: #{tpu_custom_call.1} parent=55 // pred_check_branch
          %361 = sbr.rel (%p359) target = $region60
        $region59: #{tpu_custom_call.1} parent=55 // pred_region
          %362 = dma.done %s355, 4096
        $region60: #{tpu_custom_call.1} parent=55 // pred_fallthru
          _
        // Predicated region
        $region61: #{tpu_custom_call.1} parent=55 // pred_check
          %p363 = pneg %p70
        $region62: #{tpu_custom_call.1} parent=55 // pred_check_branch
          %365 = sbr.rel (%p363) target = $region64
        $region63: #{tpu_custom_call.1} parent=55 // pred_region
          %366 = dma.done [#allocation6], 4096
        $region64: #{tpu_custom_call.1} parent=55 // pred_fallthru
          _
        // Predicated region
        $region65: #{tpu_custom_call.1} parent=55 // pred_check
          %p367 = pneg %p112
        $region66: #{tpu_custom_call.1} parent=55 // pred_check_branch
          %369 = sbr.rel (%p367) target = $region68
        $region67: #{tpu_custom_call.1} parent=55 // pred_region
          %370 = dma.done [#allocation6], 8192
        $region68: #{tpu_custom_call.1} parent=55 // pred_fallthru
          _
        // Predicated region
        $region69: #{tpu_custom_call.1} parent=55 // pred_check
          %p371 = pneg %p154
        $region70: #{tpu_custom_call.1} parent=55 // pred_check_branch
          %373 = sbr.rel (%p371) target = $region72
        $region71: #{tpu_custom_call.1} parent=55 // pred_region
          %374 = dma.done [#allocation9], 8192
        $region72: #{tpu_custom_call.1} parent=55 // pred_fallthru
          _
        // Predicated region
        $region73: #{tpu_custom_call.1} parent=55 // pred_check
          %p375 = pneg %p196
        $region74: #{tpu_custom_call.1} parent=55 // pred_check_branch
          %377 = sbr.rel (%p375) target = $region76
        $region75: #{tpu_custom_call.1} parent=55 // pred_region
          %378 = dma.done [#allocation9], 4096
        $region76: #{tpu_custom_call.1} parent=55 // pred_fallthru
          _
        %s379 = sand.u32 %s36, 1
        %s380 = scalar_lea.sflag [#allocation3], %s379
        %s381 = sand.u32 %s36, 1
        %s382 = smul.addr %s381, 256
        %s383 = scalar_lea.vmem [#allocation2], %s382
        %p384 = pneg %p49
        %p385 = pneg %p46
        %p386 = pneg %p70
        %p387 = pneg %p67
        %p388 = pneg %p91
        %p389 = pneg %p88
        %p390 = pneg %p112
        %p391 = pneg %p109
        %p392 = pneg %p133
        %p393 = pneg %p130
        %p394 = pneg %p154
        %p395 = pneg %p151
        %p396 = pneg %p175
        %p397 = pneg %p172
        %p398 = pneg %p196
        %p399 = pneg %p193
        %p400 = pneg %p217
        %p401 = pneg %p214
        %p402 = pneg %p243
        %p403 = pneg %p240
        %s404 = sand.u32 %s230, 1
        %s405 = scalar_lea.sflag [#allocation4], %s404
        %s406 = sand.u32 %s230, 1
        %s407 = smul.addr %s406, 256
        %s408 = scalar_lea.vmem [#allocation11], %s407
        %s409 = smul.u32 32, %s28
        %s410 = smul.u32 32, %s28
        %v411 = vld [vmem:[%s358] sm:$0xff]
        %v412 = vld [vmem:[%s358 + $0x8] sm:$0xff]
        %v413 = vld [vmem:[%s358 + $0x10] sm:$0xff]
        %v414 = vld [vmem:[%s358 + $0x18] sm:$0xff]
        %v415 = vld [vmem:[%s358 + $0x20] sm:$0xff]
        %v416 = vld [vmem:[%s358 + $0x28] sm:$0xff]
        %v417 = vld [vmem:[%s358 + $0x30] sm:$0xff]
        %v418 = vld [vmem:[%s358 + $0x38] sm:$0xff]
        %v419 = vld [vmem:[%s358 + $0x40] sm:$0xff]
        %v420 = vld [vmem:[%s358 + $0x48] sm:$0xff]
        %v421 = vld [vmem:[%s358 + $0x50] sm:$0xff]
        %v422 = vld [vmem:[%s358 + $0x58] sm:$0xff]
        %v423 = vld [vmem:[%s358 + $0x60] sm:$0xff]
        %v424 = vld [vmem:[%s358 + $0x68] sm:$0xff]
        %v425 = vld [vmem:[%s358 + $0x70] sm:$0xff]
        %v426 = vld [vmem:[%s358 + $0x78] sm:$0xff]
        %v427 = vld [vmem:[%s358 + $0x80] sm:$0xff]
        %v428 = vld [vmem:[%s358 + $0x88] sm:$0xff]
        %v429 = vld [vmem:[%s358 + $0x90] sm:$0xff]
        %v430 = vld [vmem:[%s358 + $0x98] sm:$0xff]
        %v431 = vld [vmem:[%s358 + $0xa0] sm:$0xff]
        %v432 = vld [vmem:[%s358 + $0xa8] sm:$0xff]
        %v433 = vld [vmem:[%s358 + $0xb0] sm:$0xff]
        %v434 = vld [vmem:[%s358 + $0xb8] sm:$0xff]
        %v435 = vld [vmem:[%s358 + $0xc0] sm:$0xff]
        %v436 = vld [vmem:[%s358 + $0xc8] sm:$0xff]
        %v437 = vld [vmem:[%s358 + $0xd0] sm:$0xff]
        %v438 = vld [vmem:[%s358 + $0xd8] sm:$0xff]
        %v439 = vld [vmem:[%s358 + $0xe0] sm:$0xff]
        %v440 = vld [vmem:[%s358 + $0xe8] sm:$0xff]
        %v441 = vld [vmem:[%s358 + $0xf0] sm:$0xff]
        %v442 = vld [vmem:[%s358 + $0xf8] sm:$0xff]
        %v443 = vld [vmem:[#allocation5] sm:$0xff]
        %v444 = vld [vmem:[#allocation5 + $0x8] sm:$0xff]
        %v445 = vld [vmem:[#allocation5 + $0x10] sm:$0xff]
        %v446 = vld [vmem:[#allocation5 + $0x18] sm:$0xff]
        %v447 = vld [vmem:[#allocation5 + $0x20] sm:$0xff]
        %v448 = vld [vmem:[#allocation5 + $0x28] sm:$0xff]
        %v449 = vld [vmem:[#allocation5 + $0x30] sm:$0xff]
        %v450 = vld [vmem:[#allocation5 + $0x38] sm:$0xff]
        %v451 = vld [vmem:[#allocation5 + $0x40] sm:$0xff]
        %v452 = vld [vmem:[#allocation5 + $0x48] sm:$0xff]
        %v453 = vld [vmem:[#allocation5 + $0x50] sm:$0xff]
        %v454 = vld [vmem:[#allocation5 + $0x58] sm:$0xff]
        %v455 = vld [vmem:[#allocation5 + $0x60] sm:$0xff]
        %v456 = vld [vmem:[#allocation5 + $0x68] sm:$0xff]
        %v457 = vld [vmem:[#allocation5 + $0x70] sm:$0xff]
        %v458 = vld [vmem:[#allocation5 + $0x78] sm:$0xff]
        %v459 = vld [vmem:[#allocation5 + $0x80] sm:$0xff]
        %v460 = vld [vmem:[#allocation5 + $0x88] sm:$0xff]
        %v461 = vld [vmem:[#allocation5 + $0x90] sm:$0xff]
        %v462 = vld [vmem:[#allocation5 + $0x98] sm:$0xff]
        %v463 = vld [vmem:[#allocation5 + $0xa0] sm:$0xff]
        %v464 = vld [vmem:[#allocation5 + $0xa8] sm:$0xff]
        %v465 = vld [vmem:[#allocation5 + $0xb0] sm:$0xff]
        %v466 = vld [vmem:[#allocation5 + $0xb8] sm:$0xff]
        %v467 = vld [vmem:[#allocation5 + $0xc0] sm:$0xff]
        %v468 = vld [vmem:[#allocation5 + $0xc8] sm:$0xff]
        %v469 = vld [vmem:[#allocation5 + $0xd0] sm:$0xff]
        %v470 = vld [vmem:[#allocation5 + $0xd8] sm:$0xff]
        %v471 = vld [vmem:[#allocation5 + $0xe0] sm:$0xff]
        %v472 = vld [vmem:[#allocation5 + $0xe8] sm:$0xff]
        %v473 = vld [vmem:[#allocation5 + $0xf0] sm:$0xff]
        %v474 = vld [vmem:[#allocation5 + $0xf8] sm:$0xff]
        %v475 = vld [vmem:[%s2] sm:$0x3]
        %v477 = vlaneseq
        %v478 = vshrl.u32 %v477, 7
        %v479 = vsub.s32 0, %v478
        %v480 = vrot.slane %v475, %v479
        %v481 = vlaneseq
        %v482 = vshrl.u32 %v481, 7
        %v483 = vsub.s32 1, %v482
        %v484 = vrot.slane %v475, %v483
        %487 = vmatprep.subr.mxu0 %v444
        %488 = vmatpush1.msra.mxu0 %v443
        %489 = vmatprep.subr.mxu0 %v446
        %490 = vmatpush1.msra.mxu0 %v445
        %491 = vmatprep.subr.mxu0 %v448
        %492 = vmatpush1.msra.mxu0 %v447
        %493 = vmatprep.subr.mxu0 %v450
        %494 = vmatpush1.msra.mxu0 %v449
        %495 = vmatprep.subr.mxu0 %v452
        %496 = vmatpush1.msra.mxu0 %v451
        %497 = vmatprep.subr.mxu0 %v454
        %498 = vmatpush1.msra.mxu0 %v453
        %499 = vmatprep.subr.mxu0 %v456
        %500 = vmatpush1.msra.mxu0 %v455
        %501 = vmatprep.subr.mxu0 %v458
        %502 = vmatpush1.msra.mxu0 %v457
        %503 = vmatprep.subr.mxu0 %v460
        %504 = vmatpush1.msra.mxu0 %v459
        %505 = vmatprep.subr.mxu0 %v462
        %506 = vmatpush1.msra.mxu0 %v461
        %507 = vmatprep.subr.mxu0 %v464
        %508 = vmatpush1.msra.mxu0 %v463
        %509 = vmatprep.subr.mxu0 %v466
        %510 = vmatpush1.msra.mxu0 %v465
        %511 = vmatprep.subr.mxu0 %v468
        %512 = vmatpush1.msra.mxu0 %v467
        %513 = vmatprep.subr.mxu0 %v470
        %514 = vmatpush1.msra.mxu0 %v469
        %515 = vmatprep.subr.mxu0 %v472
        %516 = vmatpush1.msra.mxu0 %v471
        %517 = vmatprep.subr.mxu0 %v474
        %518 = vmatpush1.msra.mxu0 %v473
        %519 = vmatprep.subr.mxu0 0.0
        %520 = vmatpush1.msra.mxu0 0.0
        %521 = vmatprep.subr.mxu0 0.0
        %522 = vmatpush1.msra.mxu0 0.0
        %523 = vmatprep.subr.mxu0 0.0
        %524 = vmatpush1.msra.mxu0 0.0
        %525 = vmatprep.subr.mxu0 0.0
        %526 = vmatpush1.msra.mxu0 0.0
        %527 = vmatprep.subr.mxu0 0.0
        %528 = vmatpush1.msra.mxu0 0.0
        %529 = vmatprep.subr.mxu0 0.0
        %530 = vmatpush1.msra.mxu0 0.0
        %531 = vmatprep.subr.mxu0 0.0
        %532 = vmatpush1.msra.mxu0 0.0
        %533 = vmatprep.subr.mxu0 0.0
        %534 = vmatpush1.msra.mxu0 0.0
        %535 = vmatprep.subr.mxu0 0.0
        %536 = vmatpush1.msra.mxu0 0.0
        %537 = vmatprep.subr.mxu0 0.0
        %538 = vmatpush1.msra.mxu0 0.0
        %539 = vmatprep.subr.mxu0 0.0
        %540 = vmatpush1.msra.mxu0 0.0
        %541 = vmatprep.subr.mxu0 0.0
        %542 = vmatpush1.msra.mxu0 0.0
        %543 = vmatprep.subr.mxu0 0.0
        %544 = vmatpush1.msra.mxu0 0.0
        %545 = vmatprep.subr.mxu0 0.0
        %546 = vmatpush1.msra.mxu0 0.0
        %547 = vmatprep.subr.mxu0 0.0
        %548 = vmatpush1.msra.mxu0 0.0
        %549 = vmatprep.subr.mxu0 0.0
        %550 = vmatpush1.msra.mxu0 0.0
        %551 = vmatprep.mubr.f32.mxu0 0.0
        %552 = vmatmul.mubr.f32.gmra.mrb[0].mxu0 %v411
        %v553 = vpop.f32.mrb[0].mxu0
        %v554 = vadd.f32 %v480, %v553
        %v555 = vpop.f32.mrb[0].mxu0
        %v556 = vadd.f32 %v484, %v555
        %557 = vmatprep.mubr.f32.mxu0 0.0
        %558 = vmatmul.mubr.f32.gmra.mrb[0].mxu0 %v412
        %v559 = vpop.f32.mrb[0].mxu0
        %v560 = vadd.f32 %v480, %v559
        %v561 = vpop.f32.mrb[0].mxu0
        %v562 = vadd.f32 %v484, %v561
        %563 = vmatprep.mubr.f32.mxu0 0.0
        %564 = vmatmul.mubr.f32.gmra.mrb[0].mxu0 %v413
        %v565 = vpop.f32.mrb[0].mxu0
        %v566 = vadd.f32 %v480, %v565
        %v567 = vpop.f32.mrb[0].mxu0
        %v568 = vadd.f32 %v484, %v567
        %569 = vmatprep.mubr.f32.mxu0 0.0
        %570 = vmatmul.mubr.f32.gmra.mrb[0].mxu0 %v414
        %v571 = vpop.f32.mrb[0].mxu0
        %v572 = vadd.f32 %v480, %v571
        %v573 = vpop.f32.mrb[0].mxu0
        %v574 = vadd.f32 %v484, %v573
        %575 = vmatprep.mubr.f32.mxu0 0.0
        %576 = vmatmul.mubr.f32.gmra.mrb[0].mxu0 %v415
        %v577 = vpop.f32.mrb[0].mxu0
        %v578 = vadd.f32 %v480, %v577
        %v579 = vpop.f32.mrb[0].mxu0
        %v580 = vadd.f32 %v484, %v579
        %581 = vmatprep.mubr.f32.mxu0 0.0
        %582 = vmatmul.mubr.f32.gmra.mrb[0].mxu0 %v416
        %v583 = vpop.f32.mrb[0].mxu0
        %v584 = vadd.f32 %v480, %v583
        %v585 = vpop.f32.mrb[0].mxu0
        %v586 = vadd.f32 %v484, %v585
        %587 = vmatprep.mubr.f32.mxu0 0.0
        %588 = vmatmul.mubr.f32.gmra.mrb[0].mxu0 %v417
        %v589 = vpop.f32.mrb[0].mxu0
        %v590 = vadd.f32 %v480, %v589
        %v591 = vpop.f32.mrb[0].mxu0
        %v592 = vadd.f32 %v484, %v591
        %593 = vmatprep.mubr.f32.mxu0 0.0
        %594 = vmatmul.mubr.f32.gmra.mrb[0].mxu0 %v418
        %v595 = vpop.f32.mrb[0].mxu0
        %v596 = vadd.f32 %v480, %v595
        %v597 = vpop.f32.mrb[0].mxu0
        %v598 = vadd.f32 %v484, %v597
        %599 = vmatprep.mubr.f32.mxu0 0.0
        %600 = vmatmul.mubr.f32.gmra.mrb[0].mxu0 %v419
        %v601 = vpop.f32.mrb[0].mxu0
        %v602 = vadd.f32 %v480, %v601
        %v603 = vpop.f32.mrb[0].mxu0
        %v604 = vadd.f32 %v484, %v603
        %605 = vmatprep.mubr.f32.mxu0 0.0
        %606 = vmatmul.mubr.f32.gmra.mrb[0].mxu0 %v420
        %v607 = vpop.f32.mrb[0].mxu0
        %v608 = vadd.f32 %v480, %v607
        %v609 = vpop.f32.mrb[0].mxu0
        %v610 = vadd.f32 %v484, %v609
        %611 = vmatprep.mubr.f32.mxu0 0.0
        %612 = vmatmul.mubr.f32.gmra.mrb[0].mxu0 %v421
        %v613 = vpop.f32.mrb[0].mxu0
        %v614 = vadd.f32 %v480, %v613
        %v615 = vpop.f32.mrb[0].mxu0
        %v616 = vadd.f32 %v484, %v615
        %617 = vmatprep.mubr.f32.mxu0 0.0
        %618 = vmatmul.mubr.f32.gmra.mrb[0].mxu0 %v422
        %v619 = vpop.f32.mrb[0].mxu0
        %v620 = vadd.f32 %v480, %v619
        %v621 = vpop.f32.mrb[0].mxu0
        %v622 = vadd.f32 %v484, %v621
        %623 = vmatprep.mubr.f32.mxu0 0.0
        %624 = vmatmul.mubr.f32.gmra.mrb[0].mxu0 %v423
        %v625 = vpop.f32.mrb[0].mxu0
        %v626 = vadd.f32 %v480, %v625
        %v627 = vpop.f32.mrb[0].mxu0
        %v628 = vadd.f32 %v484, %v627
        %629 = vmatprep.mubr.f32.mxu0 0.0
        %630 = vmatmul.mubr.f32.gmra.mrb[0].mxu0 %v424
        %v631 = vpop.f32.mrb[0].mxu0
        %v632 = vadd.f32 %v480, %v631
        %v633 = vpop.f32.mrb[0].mxu0
        %v634 = vadd.f32 %v484, %v633
        %635 = vmatprep.mubr.f32.mxu0 0.0
        %636 = vmatmul.mubr.f32.gmra.mrb[0].mxu0 %v425
        %v637 = vpop.f32.mrb[0].mxu0
        %v638 = vadd.f32 %v480, %v637
        %v639 = vpop.f32.mrb[0].mxu0
        %v640 = vadd.f32 %v484, %v639
        %641 = vmatprep.mubr.f32.mxu0 0.0
        %642 = vmatmul.mubr.f32.gmra.mrb[0].mxu0 %v426
        %v643 = vpop.f32.mrb[0].mxu0
        %v644 = vadd.f32 %v480, %v643
        %v645 = vpop.f32.mrb[0].mxu0
        %v646 = vadd.f32 %v484, %v645
        %647 = vmatprep.mubr.f32.mxu0 0.0
        %648 = vmatmul.mubr.f32.gmra.mrb[0].mxu0 %v427
        %v649 = vpop.f32.mrb[0].mxu0
        %v650 = vadd.f32 %v480, %v649
        %v651 = vpop.f32.mrb[0].mxu0
        %v652 = vadd.f32 %v484, %v651
        %653 = vmatprep.mubr.f32.mxu0 0.0
        %654 = vmatmul.mubr.f32.gmra.mrb[0].mxu0 %v428
        %v655 = vpop.f32.mrb[0].mxu0
        %v656 = vadd.f32 %v480, %v655
        %v657 = vpop.f32.mrb[0].mxu0
        %v658 = vadd.f32 %v484, %v657
        %659 = vmatprep.mubr.f32.mxu0 0.0
        %660 = vmatmul.mubr.f32.gmra.mrb[0].mxu0 %v429
        %v661 = vpop.f32.mrb[0].mxu0
        %v662 = vadd.f32 %v480, %v661
        %v663 = vpop.f32.mrb[0].mxu0
        %v664 = vadd.f32 %v484, %v663
        %665 = vmatprep.mubr.f32.mxu0 0.0
        %666 = vmatmul.mubr.f32.gmra.mrb[0].mxu0 %v430
        %v667 = vpop.f32.mrb[0].mxu0
        %v668 = vadd.f32 %v480, %v667
        %v669 = vpop.f32.mrb[0].mxu0
        %v670 = vadd.f32 %v484, %v669
        %671 = vmatprep.mubr.f32.mxu0 0.0
        %672 = vmatmul.mubr.f32.gmra.mrb[0].mxu0 %v431
        %v673 = vpop.f32.mrb[0].mxu0
        %v674 = vadd.f32 %v480, %v673
        %v675 = vpop.f32.mrb[0].mxu0
        %v676 = vadd.f32 %v484, %v675
        %677 = vmatprep.mubr.f32.mxu0 0.0
        %678 = vmatmul.mubr.f32.gmra.mrb[0].mxu0 %v432
        %v679 = vpop.f32.mrb[0].mxu0
        %v680 = vadd.f32 %v480, %v679
        %v681 = vpop.f32.mrb[0].mxu0
        %v682 = vadd.f32 %v484, %v681
        %683 = vmatprep.mubr.f32.mxu0 0.0
        %684 = vmatmul.mubr.f32.gmra.mrb[0].mxu0 %v433
        %v685 = vpop.f32.mrb[0].mxu0
        %v686 = vadd.f32 %v480, %v685
        %v687 = vpop.f32.mrb[0].mxu0
        %v688 = vadd.f32 %v484, %v687
        %689 = vmatprep.mubr.f32.mxu0 0.0
        %690 = vmatmul.mubr.f32.gmra.mrb[0].mxu0 %v434
        %v691 = vpop.f32.mrb[0].mxu0
        %v692 = vadd.f32 %v480, %v691
        %v693 = vpop.f32.mrb[0].mxu0
        %v694 = vadd.f32 %v484, %v693
        %695 = vmatprep.mubr.f32.mxu0 0.0
        %696 = vmatmul.mubr.f32.gmra.mrb[0].mxu0 %v435
        %v697 = vpop.f32.mrb[0].mxu0
        %v698 = vadd.f32 %v480, %v697
        %v699 = vpop.f32.mrb[0].mxu0
        %v700 = vadd.f32 %v484, %v699
        %701 = vmatprep.mubr.f32.mxu0 0.0
        %702 = vmatmul.mubr.f32.gmra.mrb[0].mxu0 %v436
        %v703 = vpop.f32.mrb[0].mxu0
        %v704 = vadd.f32 %v480, %v703
        %v705 = vpop.f32.mrb[0].mxu0
        %v706 = vadd.f32 %v484, %v705
        %707 = vmatprep.mubr.f32.mxu0 0.0
        %708 = vmatmul.mubr.f32.gmra.mrb[0].mxu0 %v437
        %v709 = vpop.f32.mrb[0].mxu0
        %v710 = vadd.f32 %v480, %v709
        %v711 = vpop.f32.mrb[0].mxu0
        %v712 = vadd.f32 %v484, %v711
        %713 = vmatprep.mubr.f32.mxu0 0.0
        %714 = vmatmul.mubr.f32.gmra.mrb[0].mxu0 %v438
        %v715 = vpop.f32.mrb[0].mxu0
        %v716 = vadd.f32 %v480, %v715
        %v717 = vpop.f32.mrb[0].mxu0
        %v718 = vadd.f32 %v484, %v717
        %719 = vmatprep.mubr.f32.mxu0 0.0
        %720 = vmatmul.mubr.f32.gmra.mrb[0].mxu0 %v439
        %v721 = vpop.f32.mrb[0].mxu0
        %v722 = vadd.f32 %v480, %v721
        %v723 = vpop.f32.mrb[0].mxu0
        %v724 = vadd.f32 %v484, %v723
        %725 = vmatprep.mubr.f32.mxu0 0.0
        %726 = vmatmul.mubr.f32.gmra.mrb[0].mxu0 %v440
        %v727 = vpop.f32.mrb[0].mxu0
        %v728 = vadd.f32 %v480, %v727
        %v729 = vpop.f32.mrb[0].mxu0
        %v730 = vadd.f32 %v484, %v729
        %731 = vmatprep.mubr.f32.mxu0 0.0
        %732 = vmatmul.mubr.f32.gmra.mrb[0].mxu0 %v441
        %v733 = vpop.f32.mrb[0].mxu0
        %v734 = vadd.f32 %v480, %v733
        %v735 = vpop.f32.mrb[0].mxu0
        %v736 = vadd.f32 %v484, %v735
        %737 = vmatprep.mubr.f32.mxu0 0.0
        %738 = vmatmul.mubr.f32.gmra.mrb[0].mxu0 %v442
        %v739 = vpop.f32.mrb[0].mxu0
        %v740 = vadd.f32 %v480, %v739
        %v741 = vpop.f32.mrb[0].mxu0
        %v742 = vadd.f32 %v484, %v741
        %743 = vdwg.mxu0
        %v744 = vld [vmem:[#allocation7] sm:$0xff]
        %v745 = vld [vmem:[#allocation7 + $0x8] sm:$0xff]
        %v746 = vld [vmem:[#allocation7 + $0x10] sm:$0xff]
        %v747 = vld [vmem:[#allocation7 + $0x18] sm:$0xff]
        %v748 = vld [vmem:[#allocation7 + $0x20] sm:$0xff]
        %v749 = vld [vmem:[#allocation7 + $0x28] sm:$0xff]
        %v750 = vld [vmem:[#allocation7 + $0x30] sm:$0xff]
        %v751 = vld [vmem:[#allocation7 + $0x38] sm:$0xff]
        %v752 = vld [vmem:[#allocation7 + $0x40] sm:$0xff]
        %v753 = vld [vmem:[#allocation7 + $0x48] sm:$0xff]
        %v754 = vld [vmem:[#allocation7 + $0x50] sm:$0xff]
        %v755 = vld [vmem:[#allocation7 + $0x58] sm:$0xff]
        %v756 = vld [vmem:[#allocation7 + $0x60] sm:$0xff]
        %v757 = vld [vmem:[#allocation7 + $0x68] sm:$0xff]
        %v758 = vld [vmem:[#allocation7 + $0x70] sm:$0xff]
        %v759 = vld [vmem:[#allocation7 + $0x78] sm:$0xff]
        %v760 = vld [vmem:[#allocation7 + $0x80] sm:$0xff]
        %v761 = vld [vmem:[#allocation7 + $0x88] sm:$0xff]
        %v762 = vld [vmem:[#allocation7 + $0x90] sm:$0xff]
        %v763 = vld [vmem:[#allocation7 + $0x98] sm:$0xff]
        %v764 = vld [vmem:[#allocation7 + $0xa0] sm:$0xff]
        %v765 = vld [vmem:[#allocation7 + $0xa8] sm:$0xff]
        %v766 = vld [vmem:[#allocation7 + $0xb0] sm:$0xff]
        %v767 = vld [vmem:[#allocation7 + $0xb8] sm:$0xff]
        %v768 = vld [vmem:[#allocation7 + $0xc0] sm:$0xff]
        %v769 = vld [vmem:[#allocation7 + $0xc8] sm:$0xff]
        %v770 = vld [vmem:[#allocation7 + $0xd0] sm:$0xff]
        %v771 = vld [vmem:[#allocation7 + $0xd8] sm:$0xff]
        %v772 = vld [vmem:[#allocation7 + $0xe0] sm:$0xff]
        %v773 = vld [vmem:[#allocation7 + $0xe8] sm:$0xff]
        %v774 = vld [vmem:[#allocation7 + $0xf0] sm:$0xff]
        %v775 = vld [vmem:[#allocation7 + $0xf8] sm:$0xff]
        %v776 = vld [vmem:[#allocation7 + $0x100] sm:$0xff]
        %v777 = vld [vmem:[#allocation7 + $0x108] sm:$0xff]
        %v778 = vld [vmem:[#allocation7 + $0x110] sm:$0xff]
        %v779 = vld [vmem:[#allocation7 + $0x118] sm:$0xff]
        %v780 = vld [vmem:[#allocation7 + $0x120] sm:$0xff]
        %v781 = vld [vmem:[#allocation7 + $0x128] sm:$0xff]
        %v782 = vld [vmem:[#allocation7 + $0x130] sm:$0xff]
        %v783 = vld [vmem:[#allocation7 + $0x138] sm:$0xff]
        %v784 = vld [vmem:[#allocation7 + $0x140] sm:$0xff]
        %v785 = vld [vmem:[#allocation7 + $0x148] sm:$0xff]
        %v786 = vld [vmem:[#allocation7 + $0x150] sm:$0xff]
        %v787 = vld [vmem:[#allocation7 + $0x158] sm:$0xff]
        %v788 = vld [vmem:[#allocation7 + $0x160] sm:$0xff]
        %v789 = vld [vmem:[#allocation7 + $0x168] sm:$0xff]
        %v790 = vld [vmem:[#allocation7 + $0x170] sm:$0xff]
        %v791 = vld [vmem:[#allocation7 + $0x178] sm:$0xff]
        %v792 = vld [vmem:[#allocation7 + $0x180] sm:$0xff]
        %v793 = vld [vmem:[#allocation7 + $0x188] sm:$0xff]
        %v794 = vld [vmem:[#allocation7 + $0x190] sm:$0xff]
        %v795 = vld [vmem:[#allocation7 + $0x198] sm:$0xff]
        %v796 = vld [vmem:[#allocation7 + $0x1a0] sm:$0xff]
        %v797 = vld [vmem:[#allocation7 + $0x1a8] sm:$0xff]
        %v798 = vld [vmem:[#allocation7 + $0x1b0] sm:$0xff]
        %v799 = vld [vmem:[#allocation7 + $0x1b8] sm:$0xff]
        %v800 = vld [vmem:[#allocation7 + $0x1c0] sm:$0xff]
        %v801 = vld [vmem:[#allocation7 + $0x1c8] sm:$0xff]
        %v802 = vld [vmem:[#allocation7 + $0x1d0] sm:$0xff]
        %v803 = vld [vmem:[#allocation7 + $0x1d8] sm:$0xff]
        %v804 = vld [vmem:[#allocation7 + $0x1e0] sm:$0xff]
        %v805 = vld [vmem:[#allocation7 + $0x1e8] sm:$0xff]
        %v806 = vld [vmem:[#allocation7 + $0x1f0] sm:$0xff]
        %v807 = vld [vmem:[#allocation7 + $0x1f8] sm:$0xff]
        %v808 = vld [vmem:[%s4] sm:$0x3]
        %v810 = vlaneseq
        %v811 = vshrl.u32 %v810, 7
        %v812 = vsub.s32 0, %v811
        %v813 = vrot.slane %v808, %v812
        %v814 = vlaneseq
        %v815 = vshrl.u32 %v814, 7
        %v816 = vsub.s32 1, %v815
        %v817 = vrot.slane %v808, %v816
        %820 = vmatprep.subr.mxu0 %v745
        %821 = vmatpush1.msra.mxu0 %v744
        %822 = vmatprep.subr.mxu0 %v747
        %823 = vmatpush1.msra.mxu0 %v746
        %824 = vmatprep.subr.mxu0 %v749
        %825 = vmatpush1.msra.mxu0 %v748
        %826 = vmatprep.subr.mxu0 %v751
        %827 = vmatpush1.msra.mxu0 %v750
        %828 = vmatprep.subr.mxu0 %v753
        %829 = vmatpush1.msra.mxu0 %v752
        %830 = vmatprep.subr.mxu0 %v755
        %831 = vmatpush1.msra.mxu0 %v754
        %832 = vmatprep.subr.mxu0 %v757
        %833 = vmatpush1.msra.mxu0 %v756
        %834 = vmatprep.subr.mxu0 %v759
        %835 = vmatpush1.msra.mxu0 %v758
        %836 = vmatprep.subr.mxu0 %v761
        %837 = vmatpush1.msra.mxu0 %v760
        %838 = vmatprep.subr.mxu0 %v763
        %839 = vmatpush1.msra.mxu0 %v762
        %840 = vmatprep.subr.mxu0 %v765
        %841 = vmatpush1.msra.mxu0 %v764
        %842 = vmatprep.subr.mxu0 %v767
        %843 = vmatpush1.msra.mxu0 %v766
        %844 = vmatprep.subr.mxu0 %v769
        %845 = vmatpush1.msra.mxu0 %v768
        %846 = vmatprep.subr.mxu0 %v771
        %847 = vmatpush1.msra.mxu0 %v770
        %848 = vmatprep.subr.mxu0 %v773
        %849 = vmatpush1.msra.mxu0 %v772
        %850 = vmatprep.subr.mxu0 %v775
        %851 = vmatpush1.msra.mxu0 %v774
        %852 = vmatprep.subr.mxu0 %v777
        %853 = vmatpush1.msra.mxu0 %v776
        %854 = vmatprep.subr.mxu0 %v779
        %855 = vmatpush1.msra.mxu0 %v778
        %856 = vmatprep.subr.mxu0 %v781
        %857 = vmatpush1.msra.mxu0 %v780
        %858 = vmatprep.subr.mxu0 %v783
        %859 = vmatpush1.msra.mxu0 %v782
        %860 = vmatprep.subr.mxu0 %v785
        %861 = vmatpush1.msra.mxu0 %v784
        %862 = vmatprep.subr.mxu0 %v787
        %863 = vmatpush1.msra.mxu0 %v786
        %864 = vmatprep.subr.mxu0 %v789
        %865 = vmatpush1.msra.mxu0 %v788
        %866 = vmatprep.subr.mxu0 %v791
        %867 = vmatpush1.msra.mxu0 %v790
        %868 = vmatprep.subr.mxu0 %v793
        %869 = vmatpush1.msra.mxu0 %v792
        %870 = vmatprep.subr.mxu0 %v795
        %871 = vmatpush1.msra.mxu0 %v794
        %872 = vmatprep.subr.mxu0 %v797
        %873 = vmatpush1.msra.mxu0 %v796
        %874 = vmatprep.subr.mxu0 %v799
        %875 = vmatpush1.msra.mxu0 %v798
        %876 = vmatprep.subr.mxu0 %v801
        %877 = vmatpush1.msra.mxu0 %v800
        %878 = vmatprep.subr.mxu0 %v803
        %879 = vmatpush1.msra.mxu0 %v802
        %880 = vmatprep.subr.mxu0 %v805
        %881 = vmatpush1.msra.mxu0 %v804
        %882 = vmatprep.subr.mxu0 %v807
        %883 = vmatpush1.msra.mxu0 %v806
        %884 = vmatprep.mubr.f32.mxu0 %v556
        %885 = vmatmul.mubr.f32.gmra.mrb[0].mxu0 %v554
        %v886 = vpop.f32.mrb[0].mxu0
        %v887 = vadd.f32 %v813, %v886
        %v888 = vpop.f32.mrb[0].mxu0
        %v889 = vadd.f32 %v817, %v888
        %890 = vmatprep.mubr.f32.mxu0 %v562
        %891 = vmatmul.mubr.f32.gmra.mrb[0].mxu0 %v560
        %v892 = vpop.f32.mrb[0].mxu0
        %v893 = vadd.f32 %v813, %v892
        %v894 = vpop.f32.mrb[0].mxu0
        %v895 = vadd.f32 %v817, %v894
        %896 = vmatprep.mubr.f32.mxu0 %v568
        %897 = vmatmul.mubr.f32.gmra.mrb[0].mxu0 %v566
        %v898 = vpop.f32.mrb[0].mxu0
        %v899 = vadd.f32 %v813, %v898
        %v900 = vpop.f32.mrb[0].mxu0
        %v901 = vadd.f32 %v817, %v900
        %902 = vmatprep.mubr.f32.mxu0 %v574
        %903 = vmatmul.mubr.f32.gmra.mrb[0].mxu0 %v572
        %v904 = vpop.f32.mrb[0].mxu0
        %v905 = vadd.f32 %v813, %v904
        %v906 = vpop.f32.mrb[0].mxu0
        %v907 = vadd.f32 %v817, %v906
        %908 = vmatprep.mubr.f32.mxu0 %v580
        %909 = vmatmul.mubr.f32.gmra.mrb[0].mxu0 %v578
        %v910 = vpop.f32.mrb[0].mxu0
        %v911 = vadd.f32 %v813, %v910
        %v912 = vpop.f32.mrb[0].mxu0
        %v913 = vadd.f32 %v817, %v912
        %914 = vmatprep.mubr.f32.mxu0 %v586
        %915 = vmatmul.mubr.f32.gmra.mrb[0].mxu0 %v584
        %v916 = vpop.f32.mrb[0].mxu0
        %v917 = vadd.f32 %v813, %v916
        %v918 = vpop.f32.mrb[0].mxu0
        %v919 = vadd.f32 %v817, %v918
        %920 = vmatprep.mubr.f32.mxu0 %v592
        %921 = vmatmul.mubr.f32.gmra.mrb[0].mxu0 %v590
        %v922 = vpop.f32.mrb[0].mxu0
        %v923 = vadd.f32 %v813, %v922
        %v924 = vpop.f32.mrb[0].mxu0
        %v925 = vadd.f32 %v817, %v924
        %926 = vmatprep.mubr.f32.mxu0 %v598
        %927 = vmatmul.mubr.f32.gmra.mrb[0].mxu0 %v596
        %v928 = vpop.f32.mrb[0].mxu0
        %v929 = vadd.f32 %v813, %v928
        %v930 = vpop.f32.mrb[0].mxu0
        %v931 = vadd.f32 %v817, %v930
        %932 = vmatprep.mubr.f32.mxu0 %v604
        %933 = vmatmul.mubr.f32.gmra.mrb[0].mxu0 %v602
        %v934 = vpop.f32.mrb[0].mxu0
        %v935 = vadd.f32 %v813, %v934
        %v936 = vpop.f32.mrb[0].mxu0
        %v937 = vadd.f32 %v817, %v936
        %938 = vmatprep.mubr.f32.mxu0 %v610
        %939 = vmatmul.mubr.f32.gmra.mrb[0].mxu0 %v608
        %v940 = vpop.f32.mrb[0].mxu0
        %v941 = vadd.f32 %v813, %v940
        %v942 = vpop.f32.mrb[0].mxu0
        %v943 = vadd.f32 %v817, %v942
        %944 = vmatprep.mubr.f32.mxu0 %v616
        %945 = vmatmul.mubr.f32.gmra.mrb[0].mxu0 %v614
        %v946 = vpop.f32.mrb[0].mxu0
        %v947 = vadd.f32 %v813, %v946
        %v948 = vpop.f32.mrb[0].mxu0
        %v949 = vadd.f32 %v817, %v948
        %950 = vmatprep.mubr.f32.mxu0 %v622
        %951 = vmatmul.mubr.f32.gmra.mrb[0].mxu0 %v620
        %v952 = vpop.f32.mrb[0].mxu0
        %v953 = vadd.f32 %v813, %v952
        %v954 = vpop.f32.mrb[0].mxu0
        %v955 = vadd.f32 %v817, %v954
        %956 = vmatprep.mubr.f32.mxu0 %v628
        %957 = vmatmul.mubr.f32.gmra.mrb[0].mxu0 %v626
        %v958 = vpop.f32.mrb[0].mxu0
        %v959 = vadd.f32 %v813, %v958
        %v960 = vpop.f32.mrb[0].mxu0
        %v961 = vadd.f32 %v817, %v960
        %962 = vmatprep.mubr.f32.mxu0 %v634
        %963 = vmatmul.mubr.f32.gmra.mrb[0].mxu0 %v632
        %v964 = vpop.f32.mrb[0].mxu0
        %v965 = vadd.f32 %v813, %v964
        %v966 = vpop.f32.mrb[0].mxu0
        %v967 = vadd.f32 %v817, %v966
        %968 = vmatprep.mubr.f32.mxu0 %v640
        %969 = vmatmul.mubr.f32.gmra.mrb[0].mxu0 %v638
        %v970 = vpop.f32.mrb[0].mxu0
        %v971 = vadd.f32 %v813, %v970
        %v972 = vpop.f32.mrb[0].mxu0
        %v973 = vadd.f32 %v817, %v972
        %974 = vmatprep.mubr.f32.mxu0 %v646
        %975 = vmatmul.mubr.f32.gmra.mrb[0].mxu0 %v644
        %v976 = vpop.f32.mrb[0].mxu0
        %v977 = vadd.f32 %v813, %v976
        %v978 = vpop.f32.mrb[0].mxu0
        %v979 = vadd.f32 %v817, %v978
        %980 = vmatprep.mubr.f32.mxu0 %v652
        %981 = vmatmul.mubr.f32.gmra.mrb[0].mxu0 %v650
        %v982 = vpop.f32.mrb[0].mxu0
        %v983 = vadd.f32 %v813, %v982
        %v984 = vpop.f32.mrb[0].mxu0
        %v985 = vadd.f32 %v817, %v984
        %986 = vmatprep.mubr.f32.mxu0 %v658
        %987 = vmatmul.mubr.f32.gmra.mrb[0].mxu0 %v656
        %v988 = vpop.f32.mrb[0].mxu0
        %v989 = vadd.f32 %v813, %v988
        %v990 = vpop.f32.mrb[0].mxu0
        %v991 = vadd.f32 %v817, %v990
        %992 = vmatprep.mubr.f32.mxu0 %v664
        %993 = vmatmul.mubr.f32.gmra.mrb[0].mxu0 %v662
        %v994 = vpop.f32.mrb[0].mxu0
        %v995 = vadd.f32 %v813, %v994
        %v996 = vpop.f32.mrb[0].mxu0
        %v997 = vadd.f32 %v817, %v996
        %998 = vmatprep.mubr.f32.mxu0 %v670
        %999 = vmatmul.mubr.f32.gmra.mrb[0].mxu0 %v668
        %v1000 = vpop.f32.mrb[0].mxu0
        %v1001 = vadd.f32 %v813, %v1000
        %v1002 = vpop.f32.mrb[0].mxu0
        %v1003 = vadd.f32 %v817, %v1002
        %1004 = vmatprep.mubr.f32.mxu0 %v676
        %1005 = vmatmul.mubr.f32.gmra.mrb[0].mxu0 %v674
        %v1006 = vpop.f32.mrb[0].mxu0
        %v1007 = vadd.f32 %v813, %v1006
        %v1008 = vpop.f32.mrb[0].mxu0
        %v1009 = vadd.f32 %v817, %v1008
        %1010 = vmatprep.mubr.f32.mxu0 %v682
        %1011 = vmatmul.mubr.f32.gmra.mrb[0].mxu0 %v680
        %v1012 = vpop.f32.mrb[0].mxu0
        %v1013 = vadd.f32 %v813, %v1012
        %v1014 = vpop.f32.mrb[0].mxu0
        %v1015 = vadd.f32 %v817, %v1014
        %1016 = vmatprep.mubr.f32.mxu0 %v688
        %1017 = vmatmul.mubr.f32.gmra.mrb[0].mxu0 %v686
        %v1018 = vpop.f32.mrb[0].mxu0
        %v1019 = vadd.f32 %v813, %v1018
        %v1020 = vpop.f32.mrb[0].mxu0
        %v1021 = vadd.f32 %v817, %v1020
        %1022 = vmatprep.mubr.f32.mxu0 %v694
        %1023 = vmatmul.mubr.f32.gmra.mrb[0].mxu0 %v692
        %v1024 = vpop.f32.mrb[0].mxu0
        %v1025 = vadd.f32 %v813, %v1024
        %v1026 = vpop.f32.mrb[0].mxu0
        %v1027 = vadd.f32 %v817, %v1026
        %1028 = vmatprep.mubr.f32.mxu0 %v700
        %1029 = vmatmul.mubr.f32.gmra.mrb[0].mxu0 %v698
        %v1030 = vpop.f32.mrb[0].mxu0
        %v1031 = vadd.f32 %v813, %v1030
        %v1032 = vpop.f32.mrb[0].mxu0
        %v1033 = vadd.f32 %v817, %v1032
        %1034 = vmatprep.mubr.f32.mxu0 %v706
        %1035 = vmatmul.mubr.f32.gmra.mrb[0].mxu0 %v704
        %v1036 = vpop.f32.mrb[0].mxu0
        %v1037 = vadd.f32 %v813, %v1036
        %v1038 = vpop.f32.mrb[0].mxu0
        %v1039 = vadd.f32 %v817, %v1038
        %1040 = vmatprep.mubr.f32.mxu0 %v712
        %1041 = vmatmul.mubr.f32.gmra.mrb[0].mxu0 %v710
        %v1042 = vpop.f32.mrb[0].mxu0
        %v1043 = vadd.f32 %v813, %v1042
        %v1044 = vpop.f32.mrb[0].mxu0
        %v1045 = vadd.f32 %v817, %v1044
        %1046 = vmatprep.mubr.f32.mxu0 %v718
        %1047 = vmatmul.mubr.f32.gmra.mrb[0].mxu0 %v716
        %v1048 = vpop.f32.mrb[0].mxu0
        %v1049 = vadd.f32 %v813, %v1048
        %v1050 = vpop.f32.mrb[0].mxu0
        %v1051 = vadd.f32 %v817, %v1050
        %1052 = vmatprep.mubr.f32.mxu0 %v724
        %1053 = vmatmul.mubr.f32.gmra.mrb[0].mxu0 %v722
        %v1054 = vpop.f32.mrb[0].mxu0
        %v1055 = vadd.f32 %v813, %v1054
        %v1056 = vpop.f32.mrb[0].mxu0
        %v1057 = vadd.f32 %v817, %v1056
        %1058 = vmatprep.mubr.f32.mxu0 %v730
        %1059 = vmatmul.mubr.f32.gmra.mrb[0].mxu0 %v728
        %v1060 = vpop.f32.mrb[0].mxu0
        %v1061 = vadd.f32 %v813, %v1060
        %v1062 = vpop.f32.mrb[0].mxu0
        %v1063 = vadd.f32 %v817, %v1062
        %1064 = vmatprep.mubr.f32.mxu0 %v736
        %1065 = vmatmul.mubr.f32.gmra.mrb[0].mxu0 %v734
        %v1066 = vpop.f32.mrb[0].mxu0
        %v1067 = vadd.f32 %v813, %v1066
        %v1068 = vpop.f32.mrb[0].mxu0
        %v1069 = vadd.f32 %v817, %v1068
        %1070 = vmatprep.mubr.f32.mxu0 %v742
        %1071 = vmatmul.mubr.f32.gmra.mrb[0].mxu0 %v740
        %v1072 = vpop.f32.mrb[0].mxu0
        %v1073 = vadd.f32 %v813, %v1072
        %v1074 = vpop.f32.mrb[0].mxu0
        %v1075 = vadd.f32 %v817, %v1074
        %1076 = vdwg.mxu0
        %v1077 = vld [vmem:[#allocation8] sm:$0xff]
        %v1078 = vld [vmem:[#allocation8 + $0x8] sm:$0xff]
        %v1079 = vld [vmem:[#allocation8 + $0x10] sm:$0xff]
        %v1080 = vld [vmem:[#allocation8 + $0x18] sm:$0xff]
        %v1081 = vld [vmem:[#allocation8 + $0x20] sm:$0xff]
        %v1082 = vld [vmem:[#allocation8 + $0x28] sm:$0xff]
        %v1083 = vld [vmem:[#allocation8 + $0x30] sm:$0xff]
        %v1084 = vld [vmem:[#allocation8 + $0x38] sm:$0xff]
        %v1085 = vld [vmem:[#allocation8 + $0x40] sm:$0xff]
        %v1086 = vld [vmem:[#allocation8 + $0x48] sm:$0xff]
        %v1087 = vld [vmem:[#allocation8 + $0x50] sm:$0xff]
        %v1088 = vld [vmem:[#allocation8 + $0x58] sm:$0xff]
        %v1089 = vld [vmem:[#allocation8 + $0x60] sm:$0xff]
        %v1090 = vld [vmem:[#allocation8 + $0x68] sm:$0xff]
        %v1091 = vld [vmem:[#allocation8 + $0x70] sm:$0xff]
        %v1092 = vld [vmem:[#allocation8 + $0x78] sm:$0xff]
        %v1093 = vld [vmem:[#allocation8 + $0x80] sm:$0xff]
        %v1094 = vld [vmem:[#allocation8 + $0x88] sm:$0xff]
        %v1095 = vld [vmem:[#allocation8 + $0x90] sm:$0xff]
        %v1096 = vld [vmem:[#allocation8 + $0x98] sm:$0xff]
        %v1097 = vld [vmem:[#allocation8 + $0xa0] sm:$0xff]
        %v1098 = vld [vmem:[#allocation8 + $0xa8] sm:$0xff]
        %v1099 = vld [vmem:[#allocation8 + $0xb0] sm:$0xff]
        %v1100 = vld [vmem:[#allocation8 + $0xb8] sm:$0xff]
        %v1101 = vld [vmem:[#allocation8 + $0xc0] sm:$0xff]
        %v1102 = vld [vmem:[#allocation8 + $0xc8] sm:$0xff]
        %v1103 = vld [vmem:[#allocation8 + $0xd0] sm:$0xff]
        %v1104 = vld [vmem:[#allocation8 + $0xd8] sm:$0xff]
        %v1105 = vld [vmem:[#allocation8 + $0xe0] sm:$0xff]
        %v1106 = vld [vmem:[#allocation8 + $0xe8] sm:$0xff]
        %v1107 = vld [vmem:[#allocation8 + $0xf0] sm:$0xff]
        %v1108 = vld [vmem:[#allocation8 + $0xf8] sm:$0xff]
        %v1109 = vld [vmem:[#allocation8 + $0x100] sm:$0xff]
        %v1110 = vld [vmem:[#allocation8 + $0x108] sm:$0xff]
        %v1111 = vld [vmem:[#allocation8 + $0x110] sm:$0xff]
        %v1112 = vld [vmem:[#allocation8 + $0x118] sm:$0xff]
        %v1113 = vld [vmem:[#allocation8 + $0x120] sm:$0xff]
        %v1114 = vld [vmem:[#allocation8 + $0x128] sm:$0xff]
        %v1115 = vld [vmem:[#allocation8 + $0x130] sm:$0xff]
        %v1116 = vld [vmem:[#allocation8 + $0x138] sm:$0xff]
        %v1117 = vld [vmem:[#allocation8 + $0x140] sm:$0xff]
        %v1118 = vld [vmem:[#allocation8 + $0x148] sm:$0xff]
        %v1119 = vld [vmem:[#allocation8 + $0x150] sm:$0xff]
        %v1120 = vld [vmem:[#allocation8 + $0x158] sm:$0xff]
        %v1121 = vld [vmem:[#allocation8 + $0x160] sm:$0xff]
        %v1122 = vld [vmem:[#allocation8 + $0x168] sm:$0xff]
        %v1123 = vld [vmem:[#allocation8 + $0x170] sm:$0xff]
        %v1124 = vld [vmem:[#allocation8 + $0x178] sm:$0xff]
        %v1125 = vld [vmem:[#allocation8 + $0x180] sm:$0xff]
        %v1126 = vld [vmem:[#allocation8 + $0x188] sm:$0xff]
        %v1127 = vld [vmem:[#allocation8 + $0x190] sm:$0xff]
        %v1128 = vld [vmem:[#allocation8 + $0x198] sm:$0xff]
        %v1129 = vld [vmem:[#allocation8 + $0x1a0] sm:$0xff]
        %v1130 = vld [vmem:[#allocation8 + $0x1a8] sm:$0xff]
        %v1131 = vld [vmem:[#allocation8 + $0x1b0] sm:$0xff]
        %v1132 = vld [vmem:[#allocation8 + $0x1b8] sm:$0xff]
        %v1133 = vld [vmem:[#allocation8 + $0x1c0] sm:$0xff]
        %v1134 = vld [vmem:[#allocation8 + $0x1c8] sm:$0xff]
        %v1135 = vld [vmem:[#allocation8 + $0x1d0] sm:$0xff]
        %v1136 = vld [vmem:[#allocation8 + $0x1d8] sm:$0xff]
        %v1137 = vld [vmem:[#allocation8 + $0x1e0] sm:$0xff]
        %v1138 = vld [vmem:[#allocation8 + $0x1e8] sm:$0xff]
        %v1139 = vld [vmem:[#allocation8 + $0x1f0] sm:$0xff]
        %v1140 = vld [vmem:[#allocation8 + $0x1f8] sm:$0xff]
        %v1141 = vld [vmem:[%s6] sm:$0x3]
        %v1143 = vlaneseq
        %v1144 = vshrl.u32 %v1143, 7
        %v1145 = vsub.s32 0, %v1144
        %v1146 = vrot.slane %v1141, %v1145
        %v1147 = vlaneseq
        %v1148 = vshrl.u32 %v1147, 7
        %v1149 = vsub.s32 1, %v1148
        %v1150 = vrot.slane %v1141, %v1149
        %1153 = vmatprep.subr.mxu0 %v1078
        %1154 = vmatpush1.msra.mxu0 %v1077
        %1155 = vmatprep.subr.mxu0 %v1080
        %1156 = vmatpush1.msra.mxu0 %v1079
        %1157 = vmatprep.subr.mxu0 %v1082
        %1158 = vmatpush1.msra.mxu0 %v1081
        %1159 = vmatprep.subr.mxu0 %v1084
        %1160 = vmatpush1.msra.mxu0 %v1083
        %1161 = vmatprep.subr.mxu0 %v1086
        %1162 = vmatpush1.msra.mxu0 %v1085
        %1163 = vmatprep.subr.mxu0 %v1088
        %1164 = vmatpush1.msra.mxu0 %v1087
        %1165 = vmatprep.subr.mxu0 %v1090
        %1166 = vmatpush1.msra.mxu0 %v1089
        %1167 = vmatprep.subr.mxu0 %v1092
        %1168 = vmatpush1.msra.mxu0 %v1091
        %1169 = vmatprep.subr.mxu0 %v1094
        %1170 = vmatpush1.msra.mxu0 %v1093
        %1171 = vmatprep.subr.mxu0 %v1096
        %1172 = vmatpush1.msra.mxu0 %v1095
        %1173 = vmatprep.subr.mxu0 %v1098
        %1174 = vmatpush1.msra.mxu0 %v1097
        %1175 = vmatprep.subr.mxu0 %v1100
        %1176 = vmatpush1.msra.mxu0 %v1099
        %1177 = vmatprep.subr.mxu0 %v1102
        %1178 = vmatpush1.msra.mxu0 %v1101
        %1179 = vmatprep.subr.mxu0 %v1104
        %1180 = vmatpush1.msra.mxu0 %v1103
        %1181 = vmatprep.subr.mxu0 %v1106
        %1182 = vmatpush1.msra.mxu0 %v1105
        %1183 = vmatprep.subr.mxu0 %v1108
        %1184 = vmatpush1.msra.mxu0 %v1107
        %1185 = vmatprep.subr.mxu0 %v1110
        %1186 = vmatpush1.msra.mxu0 %v1109
        %1187 = vmatprep.subr.mxu0 %v1112
        %1188 = vmatpush1.msra.mxu0 %v1111
        %1189 = vmatprep.subr.mxu0 %v1114
        %1190 = vmatpush1.msra.mxu0 %v1113
        %1191 = vmatprep.subr.mxu0 %v1116
        %1192 = vmatpush1.msra.mxu0 %v1115
        %1193 = vmatprep.subr.mxu0 %v1118
        %1194 = vmatpush1.msra.mxu0 %v1117
        %1195 = vmatprep.subr.mxu0 %v1120
        %1196 = vmatpush1.msra.mxu0 %v1119
        %1197 = vmatprep.subr.mxu0 %v1122
        %1198 = vmatpush1.msra.mxu0 %v1121
        %1199 = vmatprep.subr.mxu0 %v1124
        %1200 = vmatpush1.msra.mxu0 %v1123
        %1201 = vmatprep.subr.mxu0 %v1126
        %1202 = vmatpush1.msra.mxu0 %v1125
        %1203 = vmatprep.subr.mxu0 %v1128
        %1204 = vmatpush1.msra.mxu0 %v1127
        %1205 = vmatprep.subr.mxu0 %v1130
        %1206 = vmatpush1.msra.mxu0 %v1129
        %1207 = vmatprep.subr.mxu0 %v1132
        %1208 = vmatpush1.msra.mxu0 %v1131
        %1209 = vmatprep.subr.mxu0 %v1134
        %1210 = vmatpush1.msra.mxu0 %v1133
        %1211 = vmatprep.subr.mxu0 %v1136
        %1212 = vmatpush1.msra.mxu0 %v1135
        %1213 = vmatprep.subr.mxu0 %v1138
        %1214 = vmatpush1.msra.mxu0 %v1137
        %1215 = vmatprep.subr.mxu0 %v1140
        %1216 = vmatpush1.msra.mxu0 %v1139
        %1217 = vmatprep.mubr.f32.mxu0 %v889
        %1218 = vmatmul.mubr.f32.gmra.mrb[0].mxu0 %v887
        %v1219 = vpop.f32.mrb[0].mxu0
        %v1220 = vadd.f32 %v1146, %v1219
        %v1221 = vpop.f32.mrb[0].mxu0
        %v1222 = vadd.f32 %v1150, %v1221
        %1223 = vmatprep.mubr.f32.mxu0 %v895
        %1224 = vmatmul.mubr.f32.gmra.mrb[0].mxu0 %v893
        %v1225 = vpop.f32.mrb[0].mxu0
        %v1226 = vadd.f32 %v1146, %v1225
        %v1227 = vpop.f32.mrb[0].mxu0
        %v1228 = vadd.f32 %v1150, %v1227
        %1229 = vmatprep.mubr.f32.mxu0 %v901
        %1230 = vmatmul.mubr.f32.gmra.mrb[0].mxu0 %v899
        %v1231 = vpop.f32.mrb[0].mxu0
        %v1232 = vadd.f32 %v1146, %v1231
        %v1233 = vpop.f32.mrb[0].mxu0
        %v1234 = vadd.f32 %v1150, %v1233
        %1235 = vmatprep.mubr.f32.mxu0 %v907
        %1236 = vmatmul.mubr.f32.gmra.mrb[0].mxu0 %v905
        %v1237 = vpop.f32.mrb[0].mxu0
        %v1238 = vadd.f32 %v1146, %v1237
        %v1239 = vpop.f32.mrb[0].mxu0
        %v1240 = vadd.f32 %v1150, %v1239
        %1241 = vmatprep.mubr.f32.mxu0 %v913
        %1242 = vmatmul.mubr.f32.gmra.mrb[0].mxu0 %v911
        %v1243 = vpop.f32.mrb[0].mxu0
        %v1244 = vadd.f32 %v1146, %v1243
        %v1245 = vpop.f32.mrb[0].mxu0
        %v1246 = vadd.f32 %v1150, %v1245
        %1247 = vmatprep.mubr.f32.mxu0 %v919
        %1248 = vmatmul.mubr.f32.gmra.mrb[0].mxu0 %v917
        %v1249 = vpop.f32.mrb[0].mxu0
        %v1250 = vadd.f32 %v1146, %v1249
        %v1251 = vpop.f32.mrb[0].mxu0
        %v1252 = vadd.f32 %v1150, %v1251
        %1253 = vmatprep.mubr.f32.mxu0 %v925
        %1254 = vmatmul.mubr.f32.gmra.mrb[0].mxu0 %v923
        %v1255 = vpop.f32.mrb[0].mxu0
        %v1256 = vadd.f32 %v1146, %v1255
        %v1257 = vpop.f32.mrb[0].mxu0
        %v1258 = vadd.f32 %v1150, %v1257
        %1259 = vmatprep.mubr.f32.mxu0 %v931
        %1260 = vmatmul.mubr.f32.gmra.mrb[0].mxu0 %v929
        %v1261 = vpop.f32.mrb[0].mxu0
        %v1262 = vadd.f32 %v1146, %v1261
        %v1263 = vpop.f32.mrb[0].mxu0
        %v1264 = vadd.f32 %v1150, %v1263
        %1265 = vmatprep.mubr.f32.mxu0 %v937
        %1266 = vmatmul.mubr.f32.gmra.mrb[0].mxu0 %v935
        %v1267 = vpop.f32.mrb[0].mxu0
        %v1268 = vadd.f32 %v1146, %v1267
        %v1269 = vpop.f32.mrb[0].mxu0
        %v1270 = vadd.f32 %v1150, %v1269
        %1271 = vmatprep.mubr.f32.mxu0 %v943
        %1272 = vmatmul.mubr.f32.gmra.mrb[0].mxu0 %v941
        %v1273 = vpop.f32.mrb[0].mxu0
        %v1274 = vadd.f32 %v1146, %v1273
        %v1275 = vpop.f32.mrb[0].mxu0
        %v1276 = vadd.f32 %v1150, %v1275
        %1277 = vmatprep.mubr.f32.mxu0 %v949
        %1278 = vmatmul.mubr.f32.gmra.mrb[0].mxu0 %v947
        %v1279 = vpop.f32.mrb[0].mxu0
        %v1280 = vadd.f32 %v1146, %v1279
        %v1281 = vpop.f32.mrb[0].mxu0
        %v1282 = vadd.f32 %v1150, %v1281
        %1283 = vmatprep.mubr.f32.mxu0 %v955
        %1284 = vmatmul.mubr.f32.gmra.mrb[0].mxu0 %v953
        %v1285 = vpop.f32.mrb[0].mxu0
        %v1286 = vadd.f32 %v1146, %v1285
        %v1287 = vpop.f32.mrb[0].mxu0
        %v1288 = vadd.f32 %v1150, %v1287
        %1289 = vmatprep.mubr.f32.mxu0 %v961
        %1290 = vmatmul.mubr.f32.gmra.mrb[0].mxu0 %v959
        %v1291 = vpop.f32.mrb[0].mxu0
        %v1292 = vadd.f32 %v1146, %v1291
        %v1293 = vpop.f32.mrb[0].mxu0
        %v1294 = vadd.f32 %v1150, %v1293
        %1295 = vmatprep.mubr.f32.mxu0 %v967
        %1296 = vmatmul.mubr.f32.gmra.mrb[0].mxu0 %v965
        %v1297 = vpop.f32.mrb[0].mxu0
        %v1298 = vadd.f32 %v1146, %v1297
        %v1299 = vpop.f32.mrb[0].mxu0
        %v1300 = vadd.f32 %v1150, %v1299
        %1301 = vmatprep.mubr.f32.mxu0 %v973
        %1302 = vmatmul.mubr.f32.gmra.mrb[0].mxu0 %v971
        %v1303 = vpop.f32.mrb[0].mxu0
        %v1304 = vadd.f32 %v1146, %v1303
        %v1305 = vpop.f32.mrb[0].mxu0
        %v1306 = vadd.f32 %v1150, %v1305
        %1307 = vmatprep.mubr.f32.mxu0 %v979
        %1308 = vmatmul.mubr.f32.gmra.mrb[0].mxu0 %v977
        %v1309 = vpop.f32.mrb[0].mxu0
        %v1310 = vadd.f32 %v1146, %v1309
        %v1311 = vpop.f32.mrb[0].mxu0
        %v1312 = vadd.f32 %v1150, %v1311
        %1313 = vmatprep.mubr.f32.mxu0 %v985
        %1314 = vmatmul.mubr.f32.gmra.mrb[0].mxu0 %v983
        %v1315 = vpop.f32.mrb[0].mxu0
        %v1316 = vadd.f32 %v1146, %v1315
        %v1317 = vpop.f32.mrb[0].mxu0
        %v1318 = vadd.f32 %v1150, %v1317
        %1319 = vmatprep.mubr.f32.mxu0 %v991
        %1320 = vmatmul.mubr.f32.gmra.mrb[0].mxu0 %v989
        %v1321 = vpop.f32.mrb[0].mxu0
        %v1322 = vadd.f32 %v1146, %v1321
        %v1323 = vpop.f32.mrb[0].mxu0
        %v1324 = vadd.f32 %v1150, %v1323
        %1325 = vmatprep.mubr.f32.mxu0 %v997
        %1326 = vmatmul.mubr.f32.gmra.mrb[0].mxu0 %v995
        %v1327 = vpop.f32.mrb[0].mxu0
        %v1328 = vadd.f32 %v1146, %v1327
        %v1329 = vpop.f32.mrb[0].mxu0
        %v1330 = vadd.f32 %v1150, %v1329
        %1331 = vmatprep.mubr.f32.mxu0 %v1003
        %1332 = vmatmul.mubr.f32.gmra.mrb[0].mxu0 %v1001
        %v1333 = vpop.f32.mrb[0].mxu0
        %v1334 = vadd.f32 %v1146, %v1333
        %v1335 = vpop.f32.mrb[0].mxu0
        %v1336 = vadd.f32 %v1150, %v1335
        %1337 = vmatprep.mubr.f32.mxu0 %v1009
        %1338 = vmatmul.mubr.f32.gmra.mrb[0].mxu0 %v1007
        %v1339 = vpop.f32.mrb[0].mxu0
        %v1340 = vadd.f32 %v1146, %v1339
        %v1341 = vpop.f32.mrb[0].mxu0
        %v1342 = vadd.f32 %v1150, %v1341
        %1343 = vmatprep.mubr.f32.mxu0 %v1015
        %1344 = vmatmul.mubr.f32.gmra.mrb[0].mxu0 %v1013
        %v1345 = vpop.f32.mrb[0].mxu0
        %v1346 = vadd.f32 %v1146, %v1345
        %v1347 = vpop.f32.mrb[0].mxu0
        %v1348 = vadd.f32 %v1150, %v1347
        %1349 = vmatprep.mubr.f32.mxu0 %v1021
        %1350 = vmatmul.mubr.f32.gmra.mrb[0].mxu0 %v1019
        %v1351 = vpop.f32.mrb[0].mxu0
        %v1352 = vadd.f32 %v1146, %v1351
        %v1353 = vpop.f32.mrb[0].mxu0
        %v1354 = vadd.f32 %v1150, %v1353
        %1355 = vmatprep.mubr.f32.mxu0 %v1027
        %1356 = vmatmul.mubr.f32.gmra.mrb[0].mxu0 %v1025
        %v1357 = vpop.f32.mrb[0].mxu0
        %v1358 = vadd.f32 %v1146, %v1357
        %v1359 = vpop.f32.mrb[0].mxu0
        %v1360 = vadd.f32 %v1150, %v1359
        %1361 = vmatprep.mubr.f32.mxu0 %v1033
        %1362 = vmatmul.mubr.f32.gmra.mrb[0].mxu0 %v1031
        %v1363 = vpop.f32.mrb[0].mxu0
        %v1364 = vadd.f32 %v1146, %v1363
        %v1365 = vpop.f32.mrb[0].mxu0
        %v1366 = vadd.f32 %v1150, %v1365
        %1367 = vmatprep.mubr.f32.mxu0 %v1039
        %1368 = vmatmul.mubr.f32.gmra.mrb[0].mxu0 %v1037
        %v1369 = vpop.f32.mrb[0].mxu0
        %v1370 = vadd.f32 %v1146, %v1369
        %v1371 = vpop.f32.mrb[0].mxu0
        %v1372 = vadd.f32 %v1150, %v1371
        %1373 = vmatprep.mubr.f32.mxu0 %v1045
        %1374 = vmatmul.mubr.f32.gmra.mrb[0].mxu0 %v1043
        %v1375 = vpop.f32.mrb[0].mxu0
        %v1376 = vadd.f32 %v1146, %v1375
        %v1377 = vpop.f32.mrb[0].mxu0
        %v1378 = vadd.f32 %v1150, %v1377
        %1379 = vmatprep.mubr.f32.mxu0 %v1051
        %1380 = vmatmul.mubr.f32.gmra.mrb[0].mxu0 %v1049
        %v1381 = vpop.f32.mrb[0].mxu0
        %v1382 = vadd.f32 %v1146, %v1381
        %v1383 = vpop.f32.mrb[0].mxu0
        %v1384 = vadd.f32 %v1150, %v1383
        %1385 = vmatprep.mubr.f32.mxu0 %v1057
        %1386 = vmatmul.mubr.f32.gmra.mrb[0].mxu0 %v1055
        %v1387 = vpop.f32.mrb[0].mxu0
        %v1388 = vadd.f32 %v1146, %v1387
        %v1389 = vpop.f32.mrb[0].mxu0
        %v1390 = vadd.f32 %v1150, %v1389
        %1391 = vmatprep.mubr.f32.mxu0 %v1063
        %1392 = vmatmul.mubr.f32.gmra.mrb[0].mxu0 %v1061
        %v1393 = vpop.f32.mrb[0].mxu0
        %v1394 = vadd.f32 %v1146, %v1393
        %v1395 = vpop.f32.mrb[0].mxu0
        %v1396 = vadd.f32 %v1150, %v1395
        %1397 = vmatprep.mubr.f32.mxu0 %v1069
        %1398 = vmatmul.mubr.f32.gmra.mrb[0].mxu0 %v1067
        %v1399 = vpop.f32.mrb[0].mxu0
        %v1400 = vadd.f32 %v1146, %v1399
        %v1401 = vpop.f32.mrb[0].mxu0
        %v1402 = vadd.f32 %v1150, %v1401
        %1403 = vmatprep.mubr.f32.mxu0 %v1075
        %1404 = vmatmul.mubr.f32.gmra.mrb[0].mxu0 %v1073
        %v1405 = vpop.f32.mrb[0].mxu0
        %v1406 = vadd.f32 %v1146, %v1405
        %v1407 = vpop.f32.mrb[0].mxu0
        %v1408 = vadd.f32 %v1150, %v1407
        %1409 = vdwg.mxu0
        %v1410 = vld [vmem:[#allocation10] sm:$0xff]
        %v1411 = vld [vmem:[#allocation10 + $0x8] sm:$0xff]
        %v1412 = vld [vmem:[#allocation10 + $0x10] sm:$0xff]
        %v1413 = vld [vmem:[#allocation10 + $0x18] sm:$0xff]
        %v1414 = vld [vmem:[#allocation10 + $0x20] sm:$0xff]
        %v1415 = vld [vmem:[#allocation10 + $0x28] sm:$0xff]
        %v1416 = vld [vmem:[#allocation10 + $0x30] sm:$0xff]
        %v1417 = vld [vmem:[#allocation10 + $0x38] sm:$0xff]
        %v1418 = vld [vmem:[#allocation10 + $0x40] sm:$0xff]
        %v1419 = vld [vmem:[#allocation10 + $0x48] sm:$0xff]
        %v1420 = vld [vmem:[#allocation10 + $0x50] sm:$0xff]
        %v1421 = vld [vmem:[#allocation10 + $0x58] sm:$0xff]
        %v1422 = vld [vmem:[#allocation10 + $0x60] sm:$0xff]
        %v1423 = vld [vmem:[#allocation10 + $0x68] sm:$0xff]
        %v1424 = vld [vmem:[#allocation10 + $0x70] sm:$0xff]
        %v1425 = vld [vmem:[#allocation10 + $0x78] sm:$0xff]
        %v1426 = vld [vmem:[#allocation10 + $0x80] sm:$0xff]
        %v1427 = vld [vmem:[#allocation10 + $0x88] sm:$0xff]
        %v1428 = vld [vmem:[#allocation10 + $0x90] sm:$0xff]
        %v1429 = vld [vmem:[#allocation10 + $0x98] sm:$0xff]
        %v1430 = vld [vmem:[#allocation10 + $0xa0] sm:$0xff]
        %v1431 = vld [vmem:[#allocation10 + $0xa8] sm:$0xff]
        %v1432 = vld [vmem:[#allocation10 + $0xb0] sm:$0xff]
        %v1433 = vld [vmem:[#allocation10 + $0xb8] sm:$0xff]
        %v1434 = vld [vmem:[#allocation10 + $0xc0] sm:$0xff]
        %v1435 = vld [vmem:[#allocation10 + $0xc8] sm:$0xff]
        %v1436 = vld [vmem:[#allocation10 + $0xd0] sm:$0xff]
        %v1437 = vld [vmem:[#allocation10 + $0xd8] sm:$0xff]
        %v1438 = vld [vmem:[#allocation10 + $0xe0] sm:$0xff]
        %v1439 = vld [vmem:[#allocation10 + $0xe8] sm:$0xff]
        %v1440 = vld [vmem:[#allocation10 + $0xf0] sm:$0xff]
        %v1441 = vld [vmem:[#allocation10 + $0xf8] sm:$0xff]
        %v1442 = vld [vmem:[%s8] sm:$0x1]
        %v1444 = vlaneseq
        %v1445 = vshrl.u32 %v1444, 7
        %v1446 = vsub.s32 0, %v1445
        %v1447 = vrot.slane %v1442, %v1446
        %1449 = vmatprep.subr.mxu0 0.0
        %1450 = vmatpush1.msra.mxu0 %v1410
        %1451 = vmatprep.subr.mxu0 0.0
        %1452 = vmatpush1.msra.mxu0 %v1411
        %1453 = vmatprep.subr.mxu0 0.0
        %1454 = vmatpush1.msra.mxu0 %v1412
        %1455 = vmatprep.subr.mxu0 0.0
        %1456 = vmatpush1.msra.mxu0 %v1413
        %1457 = vmatprep.subr.mxu0 0.0
        %1458 = vmatpush1.msra.mxu0 %v1414
        %1459 = vmatprep.subr.mxu0 0.0
        %1460 = vmatpush1.msra.mxu0 %v1415
        %1461 = vmatprep.subr.mxu0 0.0
        %1462 = vmatpush1.msra.mxu0 %v1416
        %1463 = vmatprep.subr.mxu0 0.0
        %1464 = vmatpush1.msra.mxu0 %v1417
        %1465 = vmatprep.subr.mxu0 0.0
        %1466 = vmatpush1.msra.mxu0 %v1418
        %1467 = vmatprep.subr.mxu0 0.0
        %1468 = vmatpush1.msra.mxu0 %v1419
        %1469 = vmatprep.subr.mxu0 0.0
        %1470 = vmatpush1.msra.mxu0 %v1420
        %1471 = vmatprep.subr.mxu0 0.0
        %1472 = vmatpush1.msra.mxu0 %v1421
        %1473 = vmatprep.subr.mxu0 0.0
        %1474 = vmatpush1.msra.mxu0 %v1422
        %1475 = vmatprep.subr.mxu0 0.0
        %1476 = vmatpush1.msra.mxu0 %v1423
        %1477 = vmatprep.subr.mxu0 0.0
        %1478 = vmatpush1.msra.mxu0 %v1424
        %1479 = vmatprep.subr.mxu0 0.0
        %1480 = vmatpush1.msra.mxu0 %v1425
        %1481 = vmatprep.subr.mxu0 0.0
        %1482 = vmatpush1.msra.mxu0 %v1426
        %1483 = vmatprep.subr.mxu0 0.0
        %1484 = vmatpush1.msra.mxu0 %v1427
        %1485 = vmatprep.subr.mxu0 0.0
        %1486 = vmatpush1.msra.mxu0 %v1428
        %1487 = vmatprep.subr.mxu0 0.0
        %1488 = vmatpush1.msra.mxu0 %v1429
        %1489 = vmatprep.subr.mxu0 0.0
        %1490 = vmatpush1.msra.mxu0 %v1430
        %1491 = vmatprep.subr.mxu0 0.0
        %1492 = vmatpush1.msra.mxu0 %v1431
        %1493 = vmatprep.subr.mxu0 0.0
        %1494 = vmatpush1.msra.mxu0 %v1432
        %1495 = vmatprep.subr.mxu0 0.0
        %1496 = vmatpush1.msra.mxu0 %v1433
        %1497 = vmatprep.subr.mxu0 0.0
        %1498 = vmatpush1.msra.mxu0 %v1434
        %1499 = vmatprep.subr.mxu0 0.0
        %1500 = vmatpush1.msra.mxu0 %v1435
        %1501 = vmatprep.subr.mxu0 0.0
        %1502 = vmatpush1.msra.mxu0 %v1436
        %1503 = vmatprep.subr.mxu0 0.0
        %1504 = vmatpush1.msra.mxu0 %v1437
        %1505 = vmatprep.subr.mxu0 0.0
        %1506 = vmatpush1.msra.mxu0 %v1438
        %1507 = vmatprep.subr.mxu0 0.0
        %1508 = vmatpush1.msra.mxu0 %v1439
        %1509 = vmatprep.subr.mxu0 0.0
        %1510 = vmatpush1.msra.mxu0 %v1440
        %1511 = vmatprep.subr.mxu0 0.0
        %1512 = vmatpush1.msra.mxu0 %v1441
        %1513 = vmatprep.mubr.f32.mxu0 %v1222
        %1514 = vmatmul.mubr.f32.gmra.mrb[0].mxu0 %v1220
        %v1515 = vpop.f32.mrb[0].mxu0
        %v1516 = vadd.f32 %v1447, %v1515
        %v1517 = vpop.f32.mrb[0].mxu0
        %1518 = vmatprep.mubr.f32.mxu0 %v1228
        %1519 = vmatmul.mubr.f32.gmra.mrb[0].mxu0 %v1226
        %v1520 = vpop.f32.mrb[0].mxu0
        %v1521 = vadd.f32 %v1447, %v1520
        %v1522 = vpop.f32.mrb[0].mxu0
        %1523 = vmatprep.mubr.f32.mxu0 %v1234
        %1524 = vmatmul.mubr.f32.gmra.mrb[0].mxu0 %v1232
        %v1525 = vpop.f32.mrb[0].mxu0
        %v1526 = vadd.f32 %v1447, %v1525
        %v1527 = vpop.f32.mrb[0].mxu0
        %1528 = vmatprep.mubr.f32.mxu0 %v1240
        %1529 = vmatmul.mubr.f32.gmra.mrb[0].mxu0 %v1238
        %v1530 = vpop.f32.mrb[0].mxu0
        %v1531 = vadd.f32 %v1447, %v1530
        %v1532 = vpop.f32.mrb[0].mxu0
        %1533 = vmatprep.mubr.f32.mxu0 %v1246
        %1534 = vmatmul.mubr.f32.gmra.mrb[0].mxu0 %v1244
        %v1535 = vpop.f32.mrb[0].mxu0
        %v1536 = vadd.f32 %v1447, %v1535
        %v1537 = vpop.f32.mrb[0].mxu0
        %1538 = vmatprep.mubr.f32.mxu0 %v1252
        %1539 = vmatmul.mubr.f32.gmra.mrb[0].mxu0 %v1250
        %v1540 = vpop.f32.mrb[0].mxu0
        %v1541 = vadd.f32 %v1447, %v1540
        %v1542 = vpop.f32.mrb[0].mxu0
        %1543 = vmatprep.mubr.f32.mxu0 %v1258
        %1544 = vmatmul.mubr.f32.gmra.mrb[0].mxu0 %v1256
        %v1545 = vpop.f32.mrb[0].mxu0
        %v1546 = vadd.f32 %v1447, %v1545
        %v1547 = vpop.f32.mrb[0].mxu0
        %1548 = vmatprep.mubr.f32.mxu0 %v1264
        %1549 = vmatmul.mubr.f32.gmra.mrb[0].mxu0 %v1262
        %v1550 = vpop.f32.mrb[0].mxu0
        %v1551 = vadd.f32 %v1447, %v1550
        %v1552 = vpop.f32.mrb[0].mxu0
        %1553 = vmatprep.mubr.f32.mxu0 %v1270
        %1554 = vmatmul.mubr.f32.gmra.mrb[0].mxu0 %v1268
        %v1555 = vpop.f32.mrb[0].mxu0
        %v1556 = vadd.f32 %v1447, %v1555
        %v1557 = vpop.f32.mrb[0].mxu0
        %1558 = vmatprep.mubr.f32.mxu0 %v1276
        %1559 = vmatmul.mubr.f32.gmra.mrb[0].mxu0 %v1274
        %v1560 = vpop.f32.mrb[0].mxu0
        %v1561 = vadd.f32 %v1447, %v1560
        %v1562 = vpop.f32.mrb[0].mxu0
        %1563 = vmatprep.mubr.f32.mxu0 %v1282
        %1564 = vmatmul.mubr.f32.gmra.mrb[0].mxu0 %v1280
        %v1565 = vpop.f32.mrb[0].mxu0
        %v1566 = vadd.f32 %v1447, %v1565
        %v1567 = vpop.f32.mrb[0].mxu0
        %1568 = vmatprep.mubr.f32.mxu0 %v1288
        %1569 = vmatmul.mubr.f32.gmra.mrb[0].mxu0 %v1286
        %v1570 = vpop.f32.mrb[0].mxu0
        %v1571 = vadd.f32 %v1447, %v1570
        %v1572 = vpop.f32.mrb[0].mxu0
        %1573 = vmatprep.mubr.f32.mxu0 %v1294
        %1574 = vmatmul.mubr.f32.gmra.mrb[0].mxu0 %v1292
        %v1575 = vpop.f32.mrb[0].mxu0
        %v1576 = vadd.f32 %v1447, %v1575
        %v1577 = vpop.f32.mrb[0].mxu0
        %1578 = vmatprep.mubr.f32.mxu0 %v1300
        %1579 = vmatmul.mubr.f32.gmra.mrb[0].mxu0 %v1298
        %v1580 = vpop.f32.mrb[0].mxu0
        %v1581 = vadd.f32 %v1447, %v1580
        %v1582 = vpop.f32.mrb[0].mxu0
        %1583 = vmatprep.mubr.f32.mxu0 %v1306
        %1584 = vmatmul.mubr.f32.gmra.mrb[0].mxu0 %v1304
        %v1585 = vpop.f32.mrb[0].mxu0
        %v1586 = vadd.f32 %v1447, %v1585
        %v1587 = vpop.f32.mrb[0].mxu0
        %1588 = vmatprep.mubr.f32.mxu0 %v1312
        %1589 = vmatmul.mubr.f32.gmra.mrb[0].mxu0 %v1310
        %v1590 = vpop.f32.mrb[0].mxu0
        %v1591 = vadd.f32 %v1447, %v1590
        %v1592 = vpop.f32.mrb[0].mxu0
        %1593 = vmatprep.mubr.f32.mxu0 %v1318
        %1594 = vmatmul.mubr.f32.gmra.mrb[0].mxu0 %v1316
        %v1595 = vpop.f32.mrb[0].mxu0
        %v1596 = vadd.f32 %v1447, %v1595
        %v1597 = vpop.f32.mrb[0].mxu0
        %1598 = vmatprep.mubr.f32.mxu0 %v1324
        %1599 = vmatmul.mubr.f32.gmra.mrb[0].mxu0 %v1322
        %v1600 = vpop.f32.mrb[0].mxu0
        %v1601 = vadd.f32 %v1447, %v1600
        %v1602 = vpop.f32.mrb[0].mxu0
        %1603 = vmatprep.mubr.f32.mxu0 %v1330
        %1604 = vmatmul.mubr.f32.gmra.mrb[0].mxu0 %v1328
        %v1605 = vpop.f32.mrb[0].mxu0
        %v1606 = vadd.f32 %v1447, %v1605
        %v1607 = vpop.f32.mrb[0].mxu0
        %1608 = vmatprep.mubr.f32.mxu0 %v1336
        %1609 = vmatmul.mubr.f32.gmra.mrb[0].mxu0 %v1334
        %v1610 = vpop.f32.mrb[0].mxu0
        %v1611 = vadd.f32 %v1447, %v1610
        %v1612 = vpop.f32.mrb[0].mxu0
        %1613 = vmatprep.mubr.f32.mxu0 %v1342
        %1614 = vmatmul.mubr.f32.gmra.mrb[0].mxu0 %v1340
        %v1615 = vpop.f32.mrb[0].mxu0
        %v1616 = vadd.f32 %v1447, %v1615
        %v1617 = vpop.f32.mrb[0].mxu0
        %1618 = vmatprep.mubr.f32.mxu0 %v1348
        %1619 = vmatmul.mubr.f32.gmra.mrb[0].mxu0 %v1346
        %v1620 = vpop.f32.mrb[0].mxu0
        %v1621 = vadd.f32 %v1447, %v1620
        %v1622 = vpop.f32.mrb[0].mxu0
        %1623 = vmatprep.mubr.f32.mxu0 %v1354
        %1624 = vmatmul.mubr.f32.gmra.mrb[0].mxu0 %v1352
        %v1625 = vpop.f32.mrb[0].mxu0
        %v1626 = vadd.f32 %v1447, %v1625
        %v1627 = vpop.f32.mrb[0].mxu0
        %1628 = vmatprep.mubr.f32.mxu0 %v1360
        %1629 = vmatmul.mubr.f32.gmra.mrb[0].mxu0 %v1358
        %v1630 = vpop.f32.mrb[0].mxu0
        %v1631 = vadd.f32 %v1447, %v1630
        %v1632 = vpop.f32.mrb[0].mxu0
        %1633 = vmatprep.mubr.f32.mxu0 %v1366
        %1634 = vmatmul.mubr.f32.gmra.mrb[0].mxu0 %v1364
        %v1635 = vpop.f32.mrb[0].mxu0
        %v1636 = vadd.f32 %v1447, %v1635
        %v1637 = vpop.f32.mrb[0].mxu0
        %1638 = vmatprep.mubr.f32.mxu0 %v1372
        %1639 = vmatmul.mubr.f32.gmra.mrb[0].mxu0 %v1370
        %v1640 = vpop.f32.mrb[0].mxu0
        %v1641 = vadd.f32 %v1447, %v1640
        %v1642 = vpop.f32.mrb[0].mxu0
        %1643 = vmatprep.mubr.f32.mxu0 %v1378
        %1644 = vmatmul.mubr.f32.gmra.mrb[0].mxu0 %v1376
        %v1645 = vpop.f32.mrb[0].mxu0
        %v1646 = vadd.f32 %v1447, %v1645
        %v1647 = vpop.f32.mrb[0].mxu0
        %1648 = vmatprep.mubr.f32.mxu0 %v1384
        %1649 = vmatmul.mubr.f32.gmra.mrb[0].mxu0 %v1382
        %v1650 = vpop.f32.mrb[0].mxu0
        %v1651 = vadd.f32 %v1447, %v1650
        %v1652 = vpop.f32.mrb[0].mxu0
        %1653 = vmatprep.mubr.f32.mxu0 %v1390
        %1654 = vmatmul.mubr.f32.gmra.mrb[0].mxu0 %v1388
        %v1655 = vpop.f32.mrb[0].mxu0
        %v1656 = vadd.f32 %v1447, %v1655
        %v1657 = vpop.f32.mrb[0].mxu0
        %1658 = vmatprep.mubr.f32.mxu0 %v1396
        %1659 = vmatmul.mubr.f32.gmra.mrb[0].mxu0 %v1394
        %v1660 = vpop.f32.mrb[0].mxu0
        %v1661 = vadd.f32 %v1447, %v1660
        %v1662 = vpop.f32.mrb[0].mxu0
        %1663 = vmatprep.mubr.f32.mxu0 %v1402
        %1664 = vmatmul.mubr.f32.gmra.mrb[0].mxu0 %v1400
        %v1665 = vpop.f32.mrb[0].mxu0
        %v1666 = vadd.f32 %v1447, %v1665
        %v1667 = vpop.f32.mrb[0].mxu0
        %1668 = vmatprep.mubr.f32.mxu0 %v1408
        %1669 = vmatmul.mubr.f32.gmra.mrb[0].mxu0 %v1406
        %v1670 = vpop.f32.mrb[0].mxu0
        %v1671 = vadd.f32 %v1447, %v1670
        %v1672 = vpop.f32.mrb[0].mxu0
        %1673 = vdwg.mxu0
        %v1674 = vtanh.pop %v1516
        %v1675 = vtanh.pop %v1521
        %v1676 = vtanh.pop %v1526
        %v1677 = vtanh.pop %v1531
        %v1678 = vtanh.pop %v1536
        %v1679 = vtanh.pop %v1541
        %v1680 = vtanh.pop %v1546
        %v1681 = vtanh.pop %v1551
        %v1682 = vtanh.pop %v1556
        %v1683 = vtanh.pop %v1561
        %v1684 = vtanh.pop %v1566
        %v1685 = vtanh.pop %v1571
        %v1686 = vtanh.pop %v1576
        %v1687 = vtanh.pop %v1581
        %v1688 = vtanh.pop %v1586
        %v1689 = vtanh.pop %v1591
        %v1690 = vtanh.pop %v1596
        %v1691 = vtanh.pop %v1601
        %v1692 = vtanh.pop %v1606
        %v1693 = vtanh.pop %v1611
        %v1694 = vtanh.pop %v1616
        %v1695 = vtanh.pop %v1621
        %v1696 = vtanh.pop %v1626
        %v1697 = vtanh.pop %v1631
        %v1698 = vtanh.pop %v1636
        %v1699 = vtanh.pop %v1641
        %v1700 = vtanh.pop %v1646
        %v1701 = vtanh.pop %v1651
        %v1702 = vtanh.pop %v1656
        %v1703 = vtanh.pop %v1661
        %v1704 = vtanh.pop %v1666
        %v1705 = vtanh.pop %v1671
        %1706 = vst [vmem:[%s408] sm:$0xff] %v1674
        %1707 = vst [vmem:[%s408 + $0x8] sm:$0xff] %v1675
        %1708 = vst [vmem:[%s408 + $0x10] sm:$0xff] %v1676
        %1709 = vst [vmem:[%s408 + $0x18] sm:$0xff] %v1677
        %1710 = vst [vmem:[%s408 + $0x20] sm:$0xff] %v1678
        %1711 = vst [vmem:[%s408 + $0x28] sm:$0xff] %v1679
        %1712 = vst [vmem:[%s408 + $0x30] sm:$0xff] %v1680
        %1713 = vst [vmem:[%s408 + $0x38] sm:$0xff] %v1681
        %1714 = vst [vmem:[%s408 + $0x40] sm:$0xff] %v1682
        %1715 = vst [vmem:[%s408 + $0x48] sm:$0xff] %v1683
        %1716 = vst [vmem:[%s408 + $0x50] sm:$0xff] %v1684
        %1717 = vst [vmem:[%s408 + $0x58] sm:$0xff] %v1685
        %1718 = vst [vmem:[%s408 + $0x60] sm:$0xff] %v1686
        %1719 = vst [vmem:[%s408 + $0x68] sm:$0xff] %v1687
        %1720 = vst [vmem:[%s408 + $0x70] sm:$0xff] %v1688
        %1721 = vst [vmem:[%s408 + $0x78] sm:$0xff] %v1689
        %1722 = vst [vmem:[%s408 + $0x80] sm:$0xff] %v1690
        %1723 = vst [vmem:[%s408 + $0x88] sm:$0xff] %v1691
        %1724 = vst [vmem:[%s408 + $0x90] sm:$0xff] %v1692
        %1725 = vst [vmem:[%s408 + $0x98] sm:$0xff] %v1693
        %1726 = vst [vmem:[%s408 + $0xa0] sm:$0xff] %v1694
        %1727 = vst [vmem:[%s408 + $0xa8] sm:$0xff] %v1695
        %1728 = vst [vmem:[%s408 + $0xb0] sm:$0xff] %v1696
        %1729 = vst [vmem:[%s408 + $0xb8] sm:$0xff] %v1697
        %1730 = vst [vmem:[%s408 + $0xc0] sm:$0xff] %v1698
        %1731 = vst [vmem:[%s408 + $0xc8] sm:$0xff] %v1699
        %1732 = vst [vmem:[%s408 + $0xd0] sm:$0xff] %v1700
        %1733 = vst [vmem:[%s408 + $0xd8] sm:$0xff] %v1701
        %1734 = vst [vmem:[%s408 + $0xe0] sm:$0xff] %v1702
        %1735 = vst [vmem:[%s408 + $0xe8] sm:$0xff] %v1703
        %1736 = vst [vmem:[%s408 + $0xf0] sm:$0xff] %v1704
        %1737 = vst [vmem:[%s408 + $0xf8] sm:$0xff] %v1705
        %s1738 = sand.u32 %s230, 1
        %s1739 = scalar_lea.sflag [#allocation4], %s1738
        %s1740 = sand.u32 %s230, 1
        %s1741 = smul.addr %s1740, 256
        %s1742 = scalar_lea.vmem [#allocation11], %s1741
        // Predicated region
        $region77: #{tpu_custom_call.1} parent=55 // pred_check
          %p1743 = pneg %p240
        $region78: #{tpu_custom_call.1} parent=55 // pred_check_branch
          %1745 = sbr.rel (%p1743) target = $region80
        $region79: #{tpu_custom_call.1} parent=55 // pred_region
          %s1746 = smul.u32 32, %s28
          %s1748 = ssub.s32 4096, 4096
          %1749 = vsyncadd %s1739, %s1748
          %s1750 = smul.addr %s1746, 128
          %s1751 = scalar_lea.hbm %s9, %s1750
          %s1752 = sshll.u32 %s1742, 4
          %s1753 = int_to_ptr.vmem [resolvable:$true] %s1752
          %1758 = dma.vmem_to_hbm [thread:$0]  %s1753, 4096, %s1751, %s1739, 128, 128, 8
        $region80: #{tpu_custom_call.1} parent=55 // pred_fallthru
          _
      $region56: #{tpu_custom_call.1} parent=5 // pred_fallthru
        _
      %p1759 = scmp.le.s32.totalorder 2, %s23
      // Predicated region
      $region81: #{tpu_custom_call.1} parent=5 // pred_check
        %p1760 = pneg %p1759
      $region82: #{tpu_custom_call.1} parent=5 // pred_check_branch
        %1762 = sbr.rel (%p1760) target = $region84
      $region83: #{tpu_custom_call.1} parent=5 // pred_region
        %s1763 = ssub.s32 %s23, 2
        // Predicated region
        $region85: #{tpu_custom_call.1} parent=83 // pred_check
          %p1764 = pneg %p246
        $region86: #{tpu_custom_call.1} parent=83 // pred_check_branch
          %1766 = sbr.rel (%p1764) target = $region88
        $region87: #{tpu_custom_call.1} parent=83 // pred_region
          %s1767 = sand.u32 %s231, 1
          %s1768 = scalar_lea.sflag [#allocation4], %s1767
          %s1769 = sand.u32 %s231, 1
          %s1770 = smul.addr %s1769, 256
          %s1771 = scalar_lea.vmem [#allocation11], %s1770
          %1772 = dma.done %s1768, 4096
        $region88: #{tpu_custom_call.1} parent=83 // pred_fallthru
          _
      $region84: #{tpu_custom_call.1} parent=5 // pred_fallthru
        _
    $region6: #{tpu_custom_call.1} parent=1 // loop_footer
      %s27 = sadd.s32 1, %s23
    $region7: #{tpu_custom_call.1} parent=1 // loop_footer_branch
      %22 = sbr.rel target = $region3
    $region8: #{tpu_custom_call.1} parent=1 // loop_exit
      _
    %1773 = vsyncpa [#allocation3], 1
    %s1774 = scalar_lea.sflag [#allocation3], 1
    %1775 = vsyncpa %s1774, 1
    %1776 = vsyncpa [#allocation6], 1
    %1777 = vsyncpa [#allocation9], 1
    %1778 = vsyncpa [#allocation4], 1
    %s1779 = scalar_lea.sflag [#allocation4], 1
    %1780 = vsyncpa %s1779, 1

</llo_original>
